<compile_context>
chip_gen: v7x
topology: tpu7x:2x2x1
jax: 0.10.0
libtpu: 0.0.40
codegen_flags: <defaults>
</compile_context>

<pallas_src>
import functools

import jax
import jax.numpy as jnp
from jax import lax
from jax.experimental import pallas as pl
from jax.experimental.pallas import tpu as pltpu

EXPANSION = 4
BN_EPS = 1e-5


# ------------------------------ Pallas kernel -------------------------------

def _bottleneck_kernel(xc_ref, x_hbm_ref, w1_ref, b1_ref, w2_ref, b2_ref,
                       w3_ref, b3_ref, o_ref, xh_ref, h1p_ref, dma_sem,
                       *, H, W, TH, d):
    """Fused bottleneck block for one (TH, W) row tile of one image.

    xc_ref : (1, TH, W, Cin)  bf16  center rows of x (auto-pipelined block)
    x_hbm  : (N, H, W, Cin)   bf16  raw HBM ref (halo DMA source)
    w1_ref : (Cin, Cmid)      bf16  conv1 weight, BN1 scale folded in
    b1_ref : (1, Cmid)        f32   BN1 bias
    w2_ref : (9, Cmid, Cmid)  bf16  conv2 weight per (kh,kw) tap, BN2 folded
    b2_ref : (1, Cmid)        f32   BN2 bias
    w3_ref : (Cmid, Cout)     bf16  conv3 weight, BN3 scale folded in
    b3_ref : (1, Cout)        f32   BN3 bias
    o_ref  : (1, TH, W, Cout) bf16  output tile
    xh_ref : (2*d, W, Cin)    bf16  VMEM landing buffer for the halo rows
    h1p_ref: (TH+2d, W, Cmid) bf16  h1 for the tile, H-haloed (no W padding)
    dma_sem: DMA semaphores, shape (2,)
    """
    n = pl.program_id(0)
    t = pl.program_id(1)
    nt = pl.num_programs(1)
    Cin = xc_ref.shape[-1]
    Cmid = w1_ref.shape[-1]
    Cout = w3_ref.shape[-1]

    row0 = t * TH

    # ---- kick off the (small) halo DMAs so they overlap the center conv1 ----
    # Sources are clamped into the image; the clamped (junk) rows only occur on
    # boundary tiles and those h1 rows are zeroed below.
    top_src = jnp.maximum(row0 - d, 0)
    bot_src = jnp.minimum(row0 + TH, H - d)
    cp_top = pltpu.make_async_copy(
        x_hbm_ref.at[n, pl.ds(top_src, d)], xh_ref.at[pl.ds(0, d)], dma_sem.at[0])
    cp_bot = pltpu.make_async_copy(
        x_hbm_ref.at[n, pl.ds(bot_src, d)], xh_ref.at[pl.ds(d, d)], dma_sem.at[1])
    cp_top.start()
    cp_bot.start()

    # ---- conv1 (1x1) + folded BN1 + ReLU on the tile's center rows ----------
    xc2 = xc_ref[0].reshape(TH * W, Cin)          # full-width -> layout-free reshape
    h1c = jnp.maximum(
        jnp.dot(xc2, w1_ref[...], preferred_element_type=jnp.float32) + b1_ref[...],
        0.0).astype(jnp.bfloat16)
    h1p_ref[d:d + TH] = h1c.reshape(TH, W, Cmid)

    # ---- conv1 on the 2*d halo rows (after the tiny DMAs land) --------------
    cp_top.wait()
    cp_bot.wait()
    xh2 = xh_ref[...].reshape(2 * d * W, Cin)
    h1h = jnp.maximum(
        jnp.dot(xh2, w1_ref[...], preferred_element_type=jnp.float32) + b1_ref[...],
        0.0).astype(jnp.bfloat16).reshape(2 * d, W, Cmid)
    h1p_ref[0:d] = h1h[0:d]
    h1p_ref[TH + d:TH + 2 * d] = h1h[d:2 * d]

    # Out-of-image halo rows are the conv2 zero padding -> zero only those
    # strips, only on boundary tiles (no full-scratch zeroing).
    @pl.when(t == 0)
    def _():
        h1p_ref[0:d] = jnp.zeros((d, W, Cmid), jnp.bfloat16)

    @pl.when(t == nt - 1)
    def _():
        h1p_ref[TH + d:TH + 2 * d] = jnp.zeros((d, W, Cmid), jnp.bfloat16)

    # ---- conv2 (3x3, dilation d) + folded BN2 + ReLU ------------------------
    # Row taps come from the H-haloed h1 scratch; column taps are realized with
    # an XLU roll + column mask on the f32 tap result: no windowed slices, no
    # im2col, no W padding.
    col = lax.broadcasted_iota(jnp.int32, (1, W, 1), 1)
    ok_left = col >= d            # kw == 0 reads column j - d
    ok_right = col < (W - d)      # kw == 2 reads column j + d

    acc = None
    for kh in range(3):
        rows2 = h1p_ref[kh * d:kh * d + TH].reshape(TH * W, Cmid)  # contiguous
        for kw in range(3):
            tap = jnp.dot(rows2, w2_ref[kh * 3 + kw],
                          preferred_element_type=jnp.float32).reshape(TH, W, Cmid)
            if kw == 0:
                tap = jnp.where(ok_left, pltpu.roll(tap, d, axis=1), 0.0)
            elif kw == 2:
                tap = jnp.where(ok_right, pltpu.roll(tap, W - d, axis=1), 0.0)
            acc = tap if acc is None else acc + tap           # init from 1st tap
    h2 = jnp.maximum(acc + b2_ref[...], 0.0).astype(jnp.bfloat16)
    h2 = h2.reshape(TH * W, Cmid)

    # ---- conv3 (1x1) + folded BN3 + residual + ReLU -------------------------
    y3 = jnp.dot(h2, w3_ref[...], preferred_element_type=jnp.float32)
    y3 = y3 + b3_ref[...] + xc2.astype(jnp.float32)
    o_ref[0] = jnp.maximum(y3, 0.0).reshape(TH, W, Cout).astype(o_ref.dtype)


# --------------------------- weight preparation ------------------------------

def _fold_bn(gamma, beta, mean, var):
    scale = gamma / jnp.sqrt(var + BN_EPS)
    bias = beta - mean * scale
    return scale, bias


def prepare_block_weights(p):
    """Fold eval-mode BN into bf16 conv weights (do this once per network)."""
    c_mid = p["w1_oihw"].shape[0]
    c_out = c_mid * EXPANSION
    s1, b1 = _fold_bn(p["g1"], p["b1"], p["m1"], p["v1"])
    s2, b2 = _fold_bn(p["g2"], p["b2"], p["m2"], p["v2"])
    s3, b3 = _fold_bn(p["g3"], p["b3"], p["m3"], p["v3"])
    w1 = (jnp.transpose(p["w1_oihw"][:, :, 0, 0], (1, 0))
          * s1[None, :]).astype(jnp.bfloat16)                        # (Cin, Cmid)
    w2 = (jnp.transpose(p["w2_oihw"], (2, 3, 1, 0)).reshape(9, c_mid, c_mid)
          * s2[None, None, :]).astype(jnp.bfloat16)                  # (9, Cmid, Cmid)
    w3 = (jnp.transpose(p["w3_oihw"][:, :, 0, 0], (1, 0))
          * s3[None, :]).astype(jnp.bfloat16)                        # (Cmid, Cout)
    return dict(
        w1=w1, w2=w2, w3=w3,
        b1=b1.reshape(1, c_mid).astype(jnp.float32),
        b2=b2.reshape(1, c_mid).astype(jnp.float32),
        b3=b3.reshape(1, c_out).astype(jnp.float32),
    )


# --------------------------- Bottleneck forward -----------------------------

def _choose_tile_rows(H, W, Cin, Cout, d, tile_rows=None, budget_bytes=8 << 20):
    if tile_rows is not None:
        assert H % tile_rows == 0 and d <= tile_rows <= H
        return tile_rows
    divisors = [t for t in range(1, H + 1) if H % t == 0 and t >= d]
    # 2x double-buffered bf16 in + out blocks per tile.
    fits = [t for t in divisors if 2 * t * W * (Cin + Cout) * 2 <= budget_bytes]
    return max(fits) if fits else min(divisors)


def _vmem_limit_bytes(TH, W, Cin, Cmid, Cout, d):
    in_blk = TH * W * Cin * 2
    out_blk = TH * W * Cout * 2
    weights = (Cin * Cmid + 9 * Cmid * Cmid + Cmid * Cout) * 2 + (2 * Cmid + Cout) * 4
    scratch = 2 * d * W * Cin * 2 + (TH + 2 * d) * W * Cmid * 2
    need = 2 * (in_blk + out_blk) + 2 * weights + scratch
    return int(min(64 << 20, max(2 * need + (4 << 20), 32 << 20)))


def bottleneck_forward_nhwc(x_nhwc, fw, dilation=1, tile_rows=None):
    """NHWC/bf16 fused bottleneck (stride=1, downsample=None, eval-mode BN)."""
    xb = x_nhwc.astype(jnp.bfloat16)
    N, H, W, Cin = xb.shape
    Cmid = fw["w1"].shape[1]
    Cout = fw["w3"].shape[1]
    assert Cout == Cin, "downsample=None requires matching channels"
    d = int(dilation)
    assert 1 <= d <= H and d < W, "unsupported dilation for this image size"

    TH = _choose_tile_rows(H, W, Cin, Cout, d, tile_rows)
    n_tiles = H // TH
    vmem_limit = _vmem_limit_bytes(TH, W, Cin, Cmid, Cout, d)

    kernel = functools.partial(_bottleneck_kernel, H=H, W=W, TH=TH, d=d)

    return pl.pallas_call(
        kernel,
        out_shape=jax.ShapeDtypeStruct((N, H, W, Cout), jnp.bfloat16),
        grid=(N, n_tiles),
        in_specs=[
            pl.BlockSpec((1, TH, W, Cin), lambda n, t: (n, t, 0, 0)),
            pl.BlockSpec(memory_space=pl.ANY),          # same x, raw ref for halo DMA
            pl.BlockSpec((Cin, Cmid), lambda n, t: (0, 0)),
            pl.BlockSpec((1, Cmid), lambda n, t: (0, 0)),
            pl.BlockSpec((9, Cmid, Cmid), lambda n, t: (0, 0, 0)),
            pl.BlockSpec((1, Cmid), lambda n, t: (0, 0)),
            pl.BlockSpec((Cmid, Cout), lambda n, t: (0, 0)),
            pl.BlockSpec((1, Cout), lambda n, t: (0, 0)),
        ],
        out_specs=pl.BlockSpec((1, TH, W, Cout), lambda n, t: (n, t, 0, 0)),
        scratch_shapes=[
            pltpu.VMEM((2 * d, W, Cin), jnp.bfloat16),
            pltpu.VMEM((TH + 2 * d, W, Cmid), jnp.bfloat16),
            pltpu.SemaphoreType.DMA((2,)),
        ],
        compiler_params=pltpu.CompilerParams(
            dimension_semantics=("parallel", "parallel"),
            vmem_limit_bytes=vmem_limit),
    )(xb, xb, fw["w1"], fw["b1"], fw["w2"], fw["b2"], fw["w3"], fw["b3"])


def bottleneck_forward(x_nchw, params, dilation=1, tile_rows=None):
    """NCHW convenience wrapper matching the PyTorch module's interface.

    NOTE: the transpose/cast passes here exist only for parity with the NCHW
    f32 module; a real network should stay NHWC/bf16 between blocks and call
    `bottleneck_forward_nhwc` with pre-folded weights. Output is bf16 NCHW.
    """
    fw = prepare_block_weights(params)
    x_nhwc = jnp.transpose(x_nchw, (0, 2, 3, 1))
    out = bottleneck_forward_nhwc(x_nhwc, fw, dilation=dilation, tile_rows=tile_rows)
    return jnp.transpose(out, (0, 3, 1, 2))


# ------------------------- Pure-JAX reference (NCHW) ------------------------

def bottleneck_reference(x, p, dilation=1):
    def conv(x, w, padding=0, dil=1):
        return lax.conv_general_dilated(
            x, w, window_strides=(1, 1),
            padding=[(padding, padding), (padding, padding)],
            rhs_dilation=(dil, dil),
            dimension_numbers=("NCHW", "OIHW", "NCHW"))

    def bn(x, g, b, m, v):
        g, b, m, v = (t[None, :, None, None] for t in (g, b, m, v))
        return (x - m) / jnp.sqrt(v + BN_EPS) * g + b

    out = jax.nn.relu(bn(conv(x, p["w1_oihw"]), p["g1"], p["b1"], p["m1"], p["v1"]))
    out = jax.nn.relu(bn(conv(out, p["w2_oihw"], padding=dilation, dil=dilation),
                         p["g2"], p["b2"], p["m2"], p["v2"]))
    out = bn(conv(out, p["w3_oihw"]), p["g3"], p["b3"], p["m3"], p["v3"])
    return jax.nn.relu(out + x)


# --------------------------------- main --------------------------------------

def make_params(key, c_in, c_mid):
    c_out = c_mid * EXPANSION
    ks = jax.random.split(key, 16)

    def normal(k, shape, s=0.1):
        return (s * jax.random.normal(k, shape)).astype(jnp.float32)

    def pos(k, shape):
        return jax.random.uniform(k, shape, minval=0.5, maxval=1.5).astype(jnp.float32)

    return {
        "w1_oihw": normal(ks[0], (c_mid, c_in, 1, 1)),
        "w2_oihw": normal(ks[1], (c_mid, c_mid, 3, 3)),
        "w3_oihw": normal(ks[2], (c_out, c_mid, 1, 1)),
        "g1": pos(ks[3], (c_mid,)), "b1": normal(ks[4], (c_mid,)),
        "m1": normal(ks[5], (c_mid,)), "v1": pos(ks[6], (c_mid,)),
        "g2": pos(ks[7], (c_mid,)), "b2": normal(ks[8], (c_mid,)),
        "m2": normal(ks[9], (c_mid,)), "v2": pos(ks[10], (c_mid,)),
        "g3": pos(ks[11], (c_out,)), "b3": normal(ks[12], (c_out,)),
        "m3": normal(ks[13], (c_out,)), "v3": pos(ks[14], (c_out,)),
    }


if __name__ == "__main__":
    key = jax.random.PRNGKey(0)
    kx, kp = jax.random.split(key)

    # Small but lane-dense config (Cout = Cin = 128) per the perf review;
    # dilation=2 and tile_rows=4 exercise the row-tiling/halo path (4 tiles).
    N, H, W = 2, 16, 16
    num_block_channels = 32
    num_input_channels = num_block_channels * EXPANSION  # 128 -> downsample=None valid
    dilation = 2

    x = jax.random.normal(kx, (N, num_input_channels, H, W), dtype=jnp.float32)
    params = make_params(kp, num_input_channels, num_block_channels)

    fwd = jax.jit(functools.partial(bottleneck_forward, dilation=dilation, tile_rows=4))
    out = jax.block_until_ready(fwd(x, params))

    ref = jax.block_until_ready(bottleneck_reference(x, params, dilation=dilation))

    assert out.shape == (N, num_input_channels, H, W)
    # bf16 MXU operands / bf16 output vs. the all-f32 lax.conv reference.
    out_f32 = out.astype(jnp.float32)
    assert jnp.allclose(out_f32, ref, rtol=5e-2, atol=1.5e-1), \
        float(jnp.max(jnp.abs(out_f32 - ref)))
    print("KERNEL_OK")
</pallas_src>

<mosaic_0001>
module attributes {stable_mosaic.version = 11 : i64} {
  func.func @_bottleneck_kernel(%arg0: i32, %arg1: i32, %arg2: memref<1x4x16x128xbf16, #tpu.memory_space<vmem>>, %arg3: memref<2x16x16x128xbf16, #tpu.memory_space<any>>, %arg4: memref<128x32xbf16, #tpu.memory_space<vmem>>, %arg5: memref<1x32xf32, #tpu.memory_space<vmem>>, %arg6: memref<9x32x32xbf16, #tpu.memory_space<vmem>>, %arg7: memref<1x32xf32, #tpu.memory_space<vmem>>, %arg8: memref<32x128xbf16, #tpu.memory_space<vmem>>, %arg9: memref<1x128xf32, #tpu.memory_space<vmem>>, %arg10: memref<1x4x16x128xbf16, #tpu.memory_space<vmem>>, %arg11: memref<4x16x128xbf16, #tpu.memory_space<vmem>>, %arg12: memref<8x16x32xbf16, #tpu.memory_space<vmem>>, %arg13: memref<2x!tpu.dma_semaphore, #tpu.memory_space<semaphore_mem>>) attributes {dimension_semantics = [#tpu.dimension_semantics<parallel>, #tpu.dimension_semantics<parallel>], iteration_bounds = array<i64: 2, 4>, scalar_prefetch = 0 : i64, scratch_operands = 3 : i64, tpu.core_type = #tpu.core_type<tc>, window_params = [{transform_indices = @transform_0, window_bounds = array<i64: 1, 4, 16, 128>}, {}, {pipeline_mode = #tpu.pipeline_mode<synchronous>, transform_indices = @transform_2, window_bounds = array<i64: 128, 32>}, {pipeline_mode = #tpu.pipeline_mode<synchronous>, transform_indices = @transform_3, window_bounds = array<i64: 1, 32>}, {pipeline_mode = #tpu.pipeline_mode<synchronous>, transform_indices = @transform_4, window_bounds = array<i64: 9, 32, 32>}, {pipeline_mode = #tpu.pipeline_mode<synchronous>, transform_indices = @transform_5, window_bounds = array<i64: 1, 32>}, {pipeline_mode = #tpu.pipeline_mode<synchronous>, transform_indices = @transform_6, window_bounds = array<i64: 32, 128>}, {pipeline_mode = #tpu.pipeline_mode<synchronous>, transform_indices = @transform_7, window_bounds = array<i64: 1, 128>}, {transform_indices = @transform_8, window_bounds = array<i64: 1, 4, 16, 128>}]} {
    %c4_i32 = arith.constant 4 : i32
    %0 = arith.muli %arg1, %c4_i32 : i32
    %c2_i32 = arith.constant 2 : i32
    %1 = arith.subi %0, %c2_i32 : i32
    %c0_i32 = arith.constant 0 : i32
    %2 = arith.maxsi %1, %c0_i32 : i32
    %c4_i32_0 = arith.constant 4 : i32
    %3 = arith.addi %0, %c4_i32_0 : i32
    %c14_i32 = arith.constant 14 : i32
    %4 = arith.minsi %3, %c14_i32 : i32
    %c0_i32_1 = arith.constant 0 : i32
    %c0_i32_2 = arith.constant 0 : i32
    %c0_i32_3 = arith.constant 0 : i32
    %5 = tpu.memref_slice %arg3[%arg0, %2, %c0_i32_2, %c0_i32_3] : memref<2x16x16x128xbf16, #tpu.memory_space<any>> -> memref<1x2x16x128xbf16, #tpu.memory_space<any>>
    %6 = tpu.memref_squeeze %5 : memref<1x2x16x128xbf16, #tpu.memory_space<any>> -> memref<2x16x128xbf16, #tpu.memory_space<any>>
    %c0_i32_4 = arith.constant 0 : i32
    %c0_i32_5 = arith.constant 0 : i32
    %c0_i32_6 = arith.constant 0 : i32
    %7 = tpu.memref_slice %arg11[%c0_i32_4, %c0_i32_5, %c0_i32_6] : memref<4x16x128xbf16, #tpu.memory_space<vmem>> -> memref<2x16x128xbf16, #tpu.memory_space<vmem>>
    %8 = tpu.memref_slice %arg13[%c0_i32_1] : memref<2x!tpu.dma_semaphore, #tpu.memory_space<semaphore_mem>> -> memref<1x!tpu.dma_semaphore, #tpu.memory_space<semaphore_mem>>
    %9 = tpu.memref_squeeze %8 : memref<1x!tpu.dma_semaphore, #tpu.memory_space<semaphore_mem>> -> memref<!tpu.dma_semaphore, #tpu.memory_space<semaphore_mem>>
    tpu.enqueue_dma source(%6 : memref<2x16x128xbf16, #tpu.memory_space<any>>) target(%7 : memref<2x16x128xbf16, #tpu.memory_space<vmem>>) target_semaphore(%9 : memref<!tpu.dma_semaphore, #tpu.memory_space<semaphore_mem>>)
    %c1_i32 = arith.constant 1 : i32
    %c0_i32_7 = arith.constant 0 : i32
    %c0_i32_8 = arith.constant 0 : i32
    %10 = tpu.memref_slice %arg3[%arg0, %4, %c0_i32_7, %c0_i32_8] : memref<2x16x16x128xbf16, #tpu.memory_space<any>> -> memref<1x2x16x128xbf16, #tpu.memory_space<any>>
    %11 = tpu.memref_squeeze %10 : memref<1x2x16x128xbf16, #tpu.memory_space<any>> -> memref<2x16x128xbf16, #tpu.memory_space<any>>
    %c2_i32_9 = arith.constant 2 : i32
    %c0_i32_10 = arith.constant 0 : i32
    %c0_i32_11 = arith.constant 0 : i32
    %12 = tpu.memref_slice %arg11[%c2_i32_9, %c0_i32_10, %c0_i32_11] : memref<4x16x128xbf16, #tpu.memory_space<vmem>> -> memref<2x16x128xbf16, #tpu.memory_space<vmem>>
    %13 = tpu.memref_slice %arg13[%c1_i32] : memref<2x!tpu.dma_semaphore, #tpu.memory_space<semaphore_mem>> -> memref<1x!tpu.dma_semaphore, #tpu.memory_space<semaphore_mem>>
    %14 = tpu.memref_squeeze %13 : memref<1x!tpu.dma_semaphore, #tpu.memory_space<semaphore_mem>> -> memref<!tpu.dma_semaphore, #tpu.memory_space<semaphore_mem>>
    tpu.enqueue_dma source(%11 : memref<2x16x128xbf16, #tpu.memory_space<any>>) target(%12 : memref<2x16x128xbf16, #tpu.memory_space<vmem>>) target_semaphore(%14 : memref<!tpu.dma_semaphore, #tpu.memory_space<semaphore_mem>>)
    %c0 = arith.constant 0 : index
    %c0_12 = arith.constant 0 : index
    %c0_13 = arith.constant 0 : index
    %c0_14 = arith.constant 0 : index
    %15 = vector.load %arg2[%c0, %c0_12, %c0_13, %c0_14] : memref<1x4x16x128xbf16, #tpu.memory_space<vmem>>, vector<1x4x16x128xbf16>
    %16 = vector.shape_cast %15 : vector<1x4x16x128xbf16> to vector<4x16x128xbf16>
    %17 = vector.shape_cast %16 : vector<4x16x128xbf16> to vector<64x128xbf16>
    %c0_15 = arith.constant 0 : index
    %c0_16 = arith.constant 0 : index
    %18 = vector.load %arg4[%c0_15, %c0_16] : memref<128x32xbf16, #tpu.memory_space<vmem>>, vector<128x32xbf16>
    %cst = arith.constant dense<0.000000e+00> : vector<64x32xf32>
    %19 = tpu.matmul %17, %18, %cst {dimension_numbers = #tpu.dot_dimension_numbers<[1], [0], [0], [1], [0, 0, 1, 1], [], []>} : vector<64x128xbf16>, vector<128x32xbf16>, vector<64x32xf32> -> vector<64x32xf32>
    %c0_17 = arith.constant 0 : index
    %c0_18 = arith.constant 0 : index
    %20 = vector.load %arg5[%c0_17, %c0_18] : memref<1x32xf32, #tpu.memory_space<vmem>>, vector<1x32xf32>
    %21 = vector.broadcast %20 : vector<1x32xf32> to vector<64x32xf32>
    %22 = arith.addf %19, %21 : vector<64x32xf32>
    %cst_19 = arith.constant 0.000000e+00 : f32
    %23 = vector.broadcast %cst_19 : f32 to vector<64x32xf32>
    %24 = arith.maximumf %22, %23 : vector<64x32xf32>
    %25 = arith.truncf %24 : vector<64x32xf32> to vector<64x32xbf16>
    %26 = vector.shape_cast %25 : vector<64x32xbf16> to vector<4x16x32xbf16>
    %c2 = arith.constant 2 : index
    %c0_20 = arith.constant 0 : index
    %c0_21 = arith.constant 0 : index
    %27 = vector.load %arg12[%c2, %c0_20, %c0_21] : memref<8x16x32xbf16, #tpu.memory_space<vmem>>, vector<4x16x32xbf16>
    tpu.vector_store %arg12[%c2, %c0_20, %c0_21], %26 {strides = array<i32>} : memref<8x16x32xbf16, #tpu.memory_space<vmem>>, vector<4x16x32xbf16>,
    %c0_i32_22 = arith.constant 0 : i32
    %c0_i32_23 = arith.constant 0 : i32
    %c0_i32_24 = arith.constant 0 : i32
    %28 = tpu.memref_slice %arg3[%arg0, %2, %c0_i32_23, %c0_i32_24] : memref<2x16x16x128xbf16, #tpu.memory_space<any>> -> memref<1x2x16x128xbf16, #tpu.memory_space<any>>
    %29 = tpu.memref_squeeze %28 : memref<1x2x16x128xbf16, #tpu.memory_space<any>> -> memref<2x16x128xbf16, #tpu.memory_space<any>>
    %c0_i32_25 = arith.constant 0 : i32
    %c0_i32_26 = arith.constant 0 : i32
    %c0_i32_27 = arith.constant 0 : i32
    %30 = tpu.memref_slice %arg11[%c0_i32_25, %c0_i32_26, %c0_i32_27] : memref<4x16x128xbf16, #tpu.memory_space<vmem>> -> memref<2x16x128xbf16, #tpu.memory_space<vmem>>
    %31 = tpu.memref_slice %arg13[%c0_i32_22] : memref<2x!tpu.dma_semaphore, #tpu.memory_space<semaphore_mem>> -> memref<1x!tpu.dma_semaphore, #tpu.memory_space<semaphore_mem>>
    %32 = tpu.memref_squeeze %31 : memref<1x!tpu.dma_semaphore, #tpu.memory_space<semaphore_mem>> -> memref<!tpu.dma_semaphore, #tpu.memory_space<semaphore_mem>>
    tpu.wait_dma2 semaphore(%32 : memref<!tpu.dma_semaphore, #tpu.memory_space<semaphore_mem>>) src(%29 : memref<2x16x128xbf16, #tpu.memory_space<any>>) dst(%30 : memref<2x16x128xbf16, #tpu.memory_space<vmem>>)
    %c1_i32_28 = arith.constant 1 : i32
    %c0_i32_29 = arith.constant 0 : i32
    %c0_i32_30 = arith.constant 0 : i32
    %33 = tpu.memref_slice %arg3[%arg0, %4, %c0_i32_29, %c0_i32_30] : memref<2x16x16x128xbf16, #tpu.memory_space<any>> -> memref<1x2x16x128xbf16, #tpu.memory_space<any>>
    %34 = tpu.memref_squeeze %33 : memref<1x2x16x128xbf16, #tpu.memory_space<any>> -> memref<2x16x128xbf16, #tpu.memory_space<any>>
    %c2_i32_31 = arith.constant 2 : i32
    %c0_i32_32 = arith.constant 0 : i32
    %c0_i32_33 = arith.constant 0 : i32
    %35 = tpu.memref_slice %arg11[%c2_i32_31, %c0_i32_32, %c0_i32_33] : memref<4x16x128xbf16, #tpu.memory_space<vmem>> -> memref<2x16x128xbf16, #tpu.memory_space<vmem>>
    %36 = tpu.memref_slice %arg13[%c1_i32_28] : memref<2x!tpu.dma_semaphore, #tpu.memory_space<semaphore_mem>> -> memref<1x!tpu.dma_semaphore, #tpu.memory_space<semaphore_mem>>
    %37 = tpu.memref_squeeze %36 : memref<1x!tpu.dma_semaphore, #tpu.memory_space<semaphore_mem>> -> memref<!tpu.dma_semaphore, #tpu.memory_space<semaphore_mem>>
    tpu.wait_dma2 semaphore(%37 : memref<!tpu.dma_semaphore, #tpu.memory_space<semaphore_mem>>) src(%34 : memref<2x16x128xbf16, #tpu.memory_space<any>>) dst(%35 : memref<2x16x128xbf16, #tpu.memory_space<vmem>>)
    %c0_34 = arith.constant 0 : index
    %c0_35 = arith.constant 0 : index
    %c0_36 = arith.constant 0 : index
    %38 = vector.load %arg11[%c0_34, %c0_35, %c0_36] : memref<4x16x128xbf16, #tpu.memory_space<vmem>>, vector<4x16x128xbf16>
    %39 = vector.shape_cast %38 : vector<4x16x128xbf16> to vector<64x128xbf16>
    %c0_37 = arith.constant 0 : index
    %c0_38 = arith.constant 0 : index
    %40 = vector.load %arg4[%c0_37, %c0_38] : memref<128x32xbf16, #tpu.memory_space<vmem>>, vector<128x32xbf16>
    %cst_39 = arith.constant dense<0.000000e+00> : vector<64x32xf32>
    %41 = tpu.matmul %39, %40, %cst_39 {dimension_numbers = #tpu.dot_dimension_numbers<[1], [0], [0], [1], [0, 0, 1, 1], [], []>} : vector<64x128xbf16>, vector<128x32xbf16>, vector<64x32xf32> -> vector<64x32xf32>
    %c0_40 = arith.constant 0 : index
    %c0_41 = arith.constant 0 : index
    %42 = vector.load %arg5[%c0_40, %c0_41] : memref<1x32xf32, #tpu.memory_space<vmem>>, vector<1x32xf32>
    %43 = vector.broadcast %42 : vector<1x32xf32> to vector<64x32xf32>
    %44 = arith.addf %41, %43 : vector<64x32xf32>
    %cst_42 = arith.constant 0.000000e+00 : f32
    %45 = vector.broadcast %cst_42 : f32 to vector<64x32xf32>
    %46 = arith.maximumf %44, %45 : vector<64x32xf32>
    %47 = arith.truncf %46 : vector<64x32xf32> to vector<64x32xbf16>
    %48 = vector.shape_cast %47 : vector<64x32xbf16> to vector<4x16x32xbf16>
    %49 = vector.extract_strided_slice %48 {offsets = [0, 0, 0], sizes = [2, 16, 32], strides = [1, 1, 1]} : vector<4x16x32xbf16> to vector<2x16x32xbf16>
    %c0_43 = arith.constant 0 : index
    %c0_44 = arith.constant 0 : index
    %c0_45 = arith.constant 0 : index
    %50 = vector.load %arg12[%c0_43, %c0_44, %c0_45] : memref<8x16x32xbf16, #tpu.memory_space<vmem>>, vector<2x16x32xbf16>
    tpu.vector_store %arg12[%c0_43, %c0_44, %c0_45], %49 {strides = array<i32>} : memref<8x16x32xbf16, #tpu.memory_space<vmem>>, vector<2x16x32xbf16>,
    %51 = vector.extract_strided_slice %48 {offsets = [2, 0, 0], sizes = [2, 16, 32], strides = [1, 1, 1]} : vector<4x16x32xbf16> to vector<2x16x32xbf16>
    %c6 = arith.constant 6 : index
    %c0_46 = arith.constant 0 : index
    %c0_47 = arith.constant 0 : index
    %52 = vector.load %arg12[%c6, %c0_46, %c0_47] : memref<8x16x32xbf16, #tpu.memory_space<vmem>>, vector<2x16x32xbf16>
    tpu.vector_store %arg12[%c6, %c0_46, %c0_47], %51 {strides = array<i32>} : memref<8x16x32xbf16, #tpu.memory_space<vmem>>, vector<2x16x32xbf16>,
    %c0_i32_48 = arith.constant 0 : i32
    %53 = arith.cmpi eq, %arg1, %c0_i32_48 : i32
    %54 = arith.extui %53 : i1 to i32
    %c0_i32_49 = arith.constant 0 : i32
    %55 = arith.cmpi ne, %54, %c0_i32_49 : i32
    scf.if %55 {
      %cst_117 = arith.constant 0.000000e+00 : bf16
      %166 = vector.broadcast %cst_117 : bf16 to vector<2x16x32xbf16>
      %c0_118 = arith.constant 0 : index
      %c0_119 = arith.constant 0 : index
      %c0_120 = arith.constant 0 : index
      %167 = vector.load %arg12[%c0_118, %c0_119, %c0_120] : memref<8x16x32xbf16, #tpu.memory_space<vmem>>, vector<2x16x32xbf16>
      tpu.vector_store %arg12[%c0_118, %c0_119, %c0_120], %166 {strides = array<i32>} : memref<8x16x32xbf16, #tpu.memory_space<vmem>>, vector<2x16x32xbf16>,
    } else {
    }
    %c3_i32 = arith.constant 3 : i32
    %56 = arith.cmpi eq, %arg1, %c3_i32 : i32
    %57 = arith.extui %56 : i1 to i32
    %c0_i32_50 = arith.constant 0 : i32
    %58 = arith.cmpi ne, %57, %c0_i32_50 : i32
    scf.if %58 {
      %cst_117 = arith.constant 0.000000e+00 : bf16
      %166 = vector.broadcast %cst_117 : bf16 to vector<2x16x32xbf16>
      %c6_118 = arith.constant 6 : index
      %c0_119 = arith.constant 0 : index
      %c0_120 = arith.constant 0 : index
      %167 = vector.load %arg12[%c6_118, %c0_119, %c0_120] : memref<8x16x32xbf16, #tpu.memory_space<vmem>>, vector<2x16x32xbf16>
      tpu.vector_store %arg12[%c6_118, %c0_119, %c0_120], %166 {strides = array<i32>} : memref<8x16x32xbf16, #tpu.memory_space<vmem>>, vector<2x16x32xbf16>,
    } else {
    }
    %59 = tpu.iota {dimensions = array<i32: 1>} : vector<1x16x1xi32>
    %c2_i32_51 = arith.constant 2 : i32
    %60 = vector.broadcast %c2_i32_51 : i32 to vector<1x16x1xi32>
    %61 = arith.cmpi sge, %59, %60 : vector<1x16x1xi32>
    %c14_i32_52 = arith.constant 14 : i32
    %62 = vector.broadcast %c14_i32_52 : i32 to vector<1x16x1xi32>
    %63 = arith.cmpi slt, %59, %62 : vector<1x16x1xi32>
    %c0_53 = arith.constant 0 : index
    %c0_54 = arith.constant 0 : index
    %c0_55 = arith.constant 0 : index
    %64 = vector.load %arg12[%c0_53, %c0_54, %c0_55] : memref<8x16x32xbf16, #tpu.memory_space<vmem>>, vector<4x16x32xbf16>
    %65 = vector.shape_cast %64 : vector<4x16x32xbf16> to vector<64x32xbf16>
    %c0_56 = arith.constant 0 : index
    %c0_57 = arith.constant 0 : index
    %c0_58 = arith.constant 0 : index
    %66 = vector.load %arg6[%c0_56, %c0_57, %c0_58] : memref<9x32x32xbf16, #tpu.memory_space<vmem>>, vector<1x32x32xbf16>
    %67 = vector.shape_cast %66 : vector<1x32x32xbf16> to vector<32x32xbf16>
    %cst_59 = arith.constant dense<0.000000e+00> : vector<64x32xf32>
    %68 = tpu.matmul %65, %67, %cst_59 {dimension_numbers = #tpu.dot_dimension_numbers<[1], [0], [0], [1], [0, 0, 1, 1], [], []>} : vector<64x32xbf16>, vector<32x32xbf16>, vector<64x32xf32> -> vector<64x32xf32>
    %69 = vector.shape_cast %68 : vector<64x32xf32> to vector<4x16x32xf32>
    %c2_i32_60 = arith.constant 2 : i32
    %70 = tpu.dynamic_rotate %69 by %c2_i32_60 dim 1 : vector<4x16x32xf32>, i32 -> vector<4x16x32xf32>
    %cst_61 = arith.constant 0.000000e+00 : f32
    %71 = vector.shape_cast %61 : vector<1x16x1xi1> to vector<1x16x1xi1>
    %72 = vector.broadcast %71 : vector<1x16x1xi1> to vector<4x16x32xi1>
    %73 = vector.broadcast %cst_61 : f32 to vector<4x16x32xf32>
    %74 = arith.select %72, %70, %73 : vector<4x16x32xi1>, vector<4x16x32xf32>
    %c1 = arith.constant 1 : index
    %c0_62 = arith.constant 0 : index
    %c0_63 = arith.constant 0 : index
    %75 = vector.load %arg6[%c1, %c0_62, %c0_63] : memref<9x32x32xbf16, #tpu.memory_space<vmem>>, vector<1x32x32xbf16>
    %76 = vector.shape_cast %75 : vector<1x32x32xbf16> to vector<32x32xbf16>
    %cst_64 = arith.constant dense<0.000000e+00> : vector<64x32xf32>
    %77 = tpu.matmul %65, %76, %cst_64 {dimension_numbers = #tpu.dot_dimension_numbers<[1], [0], [0], [1], [0, 0, 1, 1], [], []>} : vector<64x32xbf16>, vector<32x32xbf16>, vector<64x32xf32> -> vector<64x32xf32>
    %78 = vector.shape_cast %77 : vector<64x32xf32> to vector<4x16x32xf32>
    %79 = arith.addf %74, %78 : vector<4x16x32xf32>
    %c2_65 = arith.constant 2 : index
    %c0_66 = arith.constant 0 : index
    %c0_67 = arith.constant 0 : index
    %80 = vector.load %arg6[%c2_65, %c0_66, %c0_67] : memref<9x32x32xbf16, #tpu.memory_space<vmem>>, vector<1x32x32xbf16>
    %81 = vector.shape_cast %80 : vector<1x32x32xbf16> to vector<32x32xbf16>
    %cst_68 = arith.constant dense<0.000000e+00> : vector<64x32xf32>
    %82 = tpu.matmul %65, %81, %cst_68 {dimension_numbers = #tpu.dot_dimension_numbers<[1], [0], [0], [1], [0, 0, 1, 1], [], []>} : vector<64x32xbf16>, vector<32x32xbf16>, vector<64x32xf32> -> vector<64x32xf32>
    %83 = vector.shape_cast %82 : vector<64x32xf32> to vector<4x16x32xf32>
    %c14_i32_69 = arith.constant 14 : i32
    %84 = tpu.dynamic_rotate %83 by %c14_i32_69 dim 1 : vector<4x16x32xf32>, i32 -> vector<4x16x32xf32>
    %cst_70 = arith.constant 0.000000e+00 : f32
    %85 = vector.shape_cast %63 : vector<1x16x1xi1> to vector<1x16x1xi1>
    %86 = vector.broadcast %85 : vector<1x16x1xi1> to vector<4x16x32xi1>
    %87 = vector.broadcast %cst_70 : f32 to vector<4x16x32xf32>
    %88 = arith.select %86, %84, %87 : vector<4x16x32xi1>, vector<4x16x32xf32>
    %89 = arith.addf %79, %88 : vector<4x16x32xf32>
    %c2_71 = arith.constant 2 : index
    %c0_72 = arith.constant 0 : index
    %c0_73 = arith.constant 0 : index
    %90 = vector.load %arg12[%c2_71, %c0_72, %c0_73] : memref<8x16x32xbf16, #tpu.memory_space<vmem>>, vector<4x16x32xbf16>
    %91 = vector.shape_cast %90 : vector<4x16x32xbf16> to vector<64x32xbf16>
    %c3 = arith.constant 3 : index
    %c0_74 = arith.constant 0 : index
    %c0_75 = arith.constant 0 : index
    %92 = vector.load %arg6[%c3, %c0_74, %c0_75] : memref<9x32x32xbf16, #tpu.memory_space<vmem>>, vector<1x32x32xbf16>
    %93 = vector.shape_cast %92 : vector<1x32x32xbf16> to vector<32x32xbf16>
    %cst_76 = arith.constant dense<0.000000e+00> : vector<64x32xf32>
    %94 = tpu.matmul %91, %93, %cst_76 {dimension_numbers = #tpu.dot_dimension_numbers<[1], [0], [0], [1], [0, 0, 1, 1], [], []>} : vector<64x32xbf16>, vector<32x32xbf16>, vector<64x32xf32> -> vector<64x32xf32>
    %95 = vector.shape_cast %94 : vector<64x32xf32> to vector<4x16x32xf32>
    %c2_i32_77 = arith.constant 2 : i32
    %96 = tpu.dynamic_rotate %95 by %c2_i32_77 dim 1 : vector<4x16x32xf32>, i32 -> vector<4x16x32xf32>
    %cst_78 = arith.constant 0.000000e+00 : f32
    %97 = vector.shape_cast %61 : vector<1x16x1xi1> to vector<1x16x1xi1>
    %98 = vector.broadcast %97 : vector<1x16x1xi1> to vector<4x16x32xi1>
    %99 = vector.broadcast %cst_78 : f32 to vector<4x16x32xf32>
    %100 = arith.select %98, %96, %99 : vector<4x16x32xi1>, vector<4x16x32xf32>
    %101 = arith.addf %89, %100 : vector<4x16x32xf32>
    %c4 = arith.constant 4 : index
    %c0_79 = arith.constant 0 : index
    %c0_80 = arith.constant 0 : index
    %102 = vector.load %arg6[%c4, %c0_79, %c0_80] : memref<9x32x32xbf16, #tpu.memory_space<vmem>>, vector<1x32x32xbf16>
    %103 = vector.shape_cast %102 : vector<1x32x32xbf16> to vector<32x32xbf16>
    %cst_81 = arith.constant dense<0.000000e+00> : vector<64x32xf32>
    %104 = tpu.matmul %91, %103, %cst_81 {dimension_numbers = #tpu.dot_dimension_numbers<[1], [0], [0], [1], [0, 0, 1, 1], [], []>} : vector<64x32xbf16>, vector<32x32xbf16>, vector<64x32xf32> -> vector<64x32xf32>
    %105 = vector.shape_cast %104 : vector<64x32xf32> to vector<4x16x32xf32>
    %106 = arith.addf %101, %105 : vector<4x16x32xf32>
    %c5 = arith.constant 5 : index
    %c0_82 = arith.constant 0 : index
    %c0_83 = arith.constant 0 : index
    %107 = vector.load %arg6[%c5, %c0_82, %c0_83] : memref<9x32x32xbf16, #tpu.memory_space<vmem>>, vector<1x32x32xbf16>
    %108 = vector.shape_cast %107 : vector<1x32x32xbf16> to vector<32x32xbf16>
    %cst_84 = arith.constant dense<0.000000e+00> : vector<64x32xf32>
    %109 = tpu.matmul %91, %108, %cst_84 {dimension_numbers = #tpu.dot_dimension_numbers<[1], [0], [0], [1], [0, 0, 1, 1], [], []>} : vector<64x32xbf16>, vector<32x32xbf16>, vector<64x32xf32> -> vector<64x32xf32>
    %110 = vector.shape_cast %109 : vector<64x32xf32> to vector<4x16x32xf32>
    %c14_i32_85 = arith.constant 14 : i32
    %111 = tpu.dynamic_rotate %110 by %c14_i32_85 dim 1 : vector<4x16x32xf32>, i32 -> vector<4x16x32xf32>
    %cst_86 = arith.constant 0.000000e+00 : f32
    %112 = vector.shape_cast %63 : vector<1x16x1xi1> to vector<1x16x1xi1>
    %113 = vector.broadcast %112 : vector<1x16x1xi1> to vector<4x16x32xi1>
    %114 = vector.broadcast %cst_86 : f32 to vector<4x16x32xf32>
    %115 = arith.select %113, %111, %114 : vector<4x16x32xi1>, vector<4x16x32xf32>
    %116 = arith.addf %106, %115 : vector<4x16x32xf32>
    %c4_87 = arith.constant 4 : index
    %c0_88 = arith.constant 0 : index
    %c0_89 = arith.constant 0 : index
    %117 = vector.load %arg12[%c4_87, %c0_88, %c0_89] : memref<8x16x32xbf16, #tpu.memory_space<vmem>>, vector<4x16x32xbf16>
    %118 = vector.shape_cast %117 : vector<4x16x32xbf16> to vector<64x32xbf16>
    %c6_90 = arith.constant 6 : index
    %c0_91 = arith.constant 0 : index
    %c0_92 = arith.constant 0 : index
    %119 = vector.load %arg6[%c6_90, %c0_91, %c0_92] : memref<9x32x32xbf16, #tpu.memory_space<vmem>>, vector<1x32x32xbf16>
    %120 = vector.shape_cast %119 : vector<1x32x32xbf16> to vector<32x32xbf16>
    %cst_93 = arith.constant dense<0.000000e+00> : vector<64x32xf32>
    %121 = tpu.matmul %118, %120, %cst_93 {dimension_numbers = #tpu.dot_dimension_numbers<[1], [0], [0], [1], [0, 0, 1, 1], [], []>} : vector<64x32xbf16>, vector<32x32xbf16>, vector<64x32xf32> -> vector<64x32xf32>
    %122 = vector.shape_cast %121 : vector<64x32xf32> to vector<4x16x32xf32>
    %c2_i32_94 = arith.constant 2 : i32
    %123 = tpu.dynamic_rotate %122 by %c2_i32_94 dim 1 : vector<4x16x32xf32>, i32 -> vector<4x16x32xf32>
    %cst_95 = arith.constant 0.000000e+00 : f32
    %124 = vector.shape_cast %61 : vector<1x16x1xi1> to vector<1x16x1xi1>
    %125 = vector.broadcast %124 : vector<1x16x1xi1> to vector<4x16x32xi1>
    %126 = vector.broadcast %cst_95 : f32 to vector<4x16x32xf32>
    %127 = arith.select %125, %123, %126 : vector<4x16x32xi1>, vector<4x16x32xf32>
    %128 = arith.addf %116, %127 : vector<4x16x32xf32>
    %c7 = arith.constant 7 : index
    %c0_96 = arith.constant 0 : index
    %c0_97 = arith.constant 0 : index
    %129 = vector.load %arg6[%c7, %c0_96, %c0_97] : memref<9x32x32xbf16, #tpu.memory_space<vmem>>, vector<1x32x32xbf16>
    %130 = vector.shape_cast %129 : vector<1x32x32xbf16> to vector<32x32xbf16>
    %cst_98 = arith.constant dense<0.000000e+00> : vector<64x32xf32>
    %131 = tpu.matmul %118, %130, %cst_98 {dimension_numbers = #tpu.dot_dimension_numbers<[1], [0], [0], [1], [0, 0, 1, 1], [], []>} : vector<64x32xbf16>, vector<32x32xbf16>, vector<64x32xf32> -> vector<64x32xf32>
    %132 = vector.shape_cast %131 : vector<64x32xf32> to vector<4x16x32xf32>
    %133 = arith.addf %128, %132 : vector<4x16x32xf32>
    %c8 = arith.constant 8 : index
    %c0_99 = arith.constant 0 : index
    %c0_100 = arith.constant 0 : index
    %134 = vector.load %arg6[%c8, %c0_99, %c0_100] : memref<9x32x32xbf16, #tpu.memory_space<vmem>>, vector<1x32x32xbf16>
    %135 = vector.shape_cast %134 : vector<1x32x32xbf16> to vector<32x32xbf16>
    %cst_101 = arith.constant dense<0.000000e+00> : vector<64x32xf32>
    %136 = tpu.matmul %118, %135, %cst_101 {dimension_numbers = #tpu.dot_dimension_numbers<[1], [0], [0], [1], [0, 0, 1, 1], [], []>} : vector<64x32xbf16>, vector<32x32xbf16>, vector<64x32xf32> -> vector<64x32xf32>
    %137 = vector.shape_cast %136 : vector<64x32xf32> to vector<4x16x32xf32>
    %c14_i32_102 = arith.constant 14 : i32
    %138 = tpu.dynamic_rotate %137 by %c14_i32_102 dim 1 : vector<4x16x32xf32>, i32 -> vector<4x16x32xf32>
    %cst_103 = arith.constant 0.000000e+00 : f32
    %139 = vector.shape_cast %63 : vector<1x16x1xi1> to vector<1x16x1xi1>
    %140 = vector.broadcast %139 : vector<1x16x1xi1> to vector<4x16x32xi1>
    %141 = vector.broadcast %cst_103 : f32 to vector<4x16x32xf32>
    %142 = arith.select %140, %138, %141 : vector<4x16x32xi1>, vector<4x16x32xf32>
    %143 = arith.addf %133, %142 : vector<4x16x32xf32>
    %c0_104 = arith.constant 0 : index
    %c0_105 = arith.constant 0 : index
    %144 = vector.load %arg7[%c0_104, %c0_105] : memref<1x32xf32, #tpu.memory_space<vmem>>, vector<1x32xf32>
    %145 = vector.shape_cast %144 : vector<1x32xf32> to vector<1x1x32xf32>
    %146 = vector.broadcast %145 : vector<1x1x32xf32> to vector<4x16x32xf32>
    %147 = arith.addf %143, %146 : vector<4x16x32xf32>
    %cst_106 = arith.constant 0.000000e+00 : f32
    %148 = vector.broadcast %cst_106 : f32 to vector<4x16x32xf32>
    %149 = arith.maximumf %147, %148 : vector<4x16x32xf32>
    %150 = arith.truncf %149 : vector<4x16x32xf32> to vector<4x16x32xbf16>
    %151 = vector.shape_cast %150 : vector<4x16x32xbf16> to vector<64x32xbf16>
    %c0_107 = arith.constant 0 : index
    %c0_108 = arith.constant 0 : index
    %152 = vector.load %arg8[%c0_107, %c0_108] : memref<32x128xbf16, #tpu.memory_space<vmem>>, vector<32x128xbf16>
    %cst_109 = arith.constant dense<0.000000e+00> : vector<64x128xf32>
    %153 = tpu.matmul %151, %152, %cst_109 {dimension_numbers = #tpu.dot_dimension_numbers<[1], [0], [0], [1], [0, 0, 1, 1], [], []>} : vector<64x32xbf16>, vector<32x128xbf16>, vector<64x128xf32> -> vector<64x128xf32>
    %c0_110 = arith.constant 0 : index
    %c0_111 = arith.constant 0 : index
    %154 = vector.load %arg9[%c0_110, %c0_111] : memref<1x128xf32, #tpu.memory_space<vmem>>, vector<1x128xf32>
    %155 = vector.broadcast %154 : vector<1x128xf32> to vector<64x128xf32>
    %156 = arith.addf %153, %155 : vector<64x128xf32>
    %157 = arith.extf %17 : vector<64x128xbf16> to vector<64x128xf32>
    %158 = arith.addf %156, %157 : vector<64x128xf32>
    %cst_112 = arith.constant 0.000000e+00 : f32
    %159 = vector.broadcast %cst_112 : f32 to vector<64x128xf32>
    %160 = arith.maximumf %158, %159 : vector<64x128xf32>
    %161 = vector.shape_cast %160 : vector<64x128xf32> to vector<4x16x128xf32>
    %162 = arith.truncf %161 : vector<4x16x128xf32> to vector<4x16x128xbf16>
    %c0_113 = arith.constant 0 : index
    %c0_114 = arith.constant 0 : index
    %c0_115 = arith.constant 0 : index
    %c0_116 = arith.constant 0 : index
    %163 = vector.load %arg10[%c0_113, %c0_114, %c0_115, %c0_116] : memref<1x4x16x128xbf16, #tpu.memory_space<vmem>>, vector<1x4x16x128xbf16>
    %164 = vector.shape_cast %163 : vector<1x4x16x128xbf16> to vector<4x16x128xbf16>
    %165 = vector.shape_cast %162 : vector<4x16x128xbf16> to vector<1x4x16x128xbf16>
    tpu.vector_store %arg10[%c0_113, %c0_114, %c0_115, %c0_116], %165 {strides = array<i32>} : memref<1x4x16x128xbf16, #tpu.memory_space<vmem>>, vector<1x4x16x128xbf16>,
    return
  }
  func.func @transform_0(%arg0: i32, %arg1: i32) -> (i32, i32, i32, i32) {
    %c0_i32 = arith.constant 0 : i32
    %c0_i32_0 = arith.constant 0 : i32
    %c0_i32_1 = arith.constant 0 : i32
    return %arg0, %arg1, %c0_i32, %c0_i32_0 : i32, i32, i32, i32
  }
  func.func @transform_2(%arg0: i32, %arg1: i32) -> (i32, i32) {
    %c0_i32 = arith.constant 0 : i32
    %c0_i32_0 = arith.constant 0 : i32
    %c0_i32_1 = arith.constant 0 : i32
    return %c0_i32, %c0_i32_0 : i32, i32
  }
  func.func @transform_3(%arg0: i32, %arg1: i32) -> (i32, i32) {
    %c0_i32 = arith.constant 0 : i32
    %c0_i32_0 = arith.constant 0 : i32
    %c0_i32_1 = arith.constant 0 : i32
    return %c0_i32, %c0_i32_0 : i32, i32
  }
  func.func @transform_4(%arg0: i32, %arg1: i32) -> (i32, i32, i32) {
    %c0_i32 = arith.constant 0 : i32
    %c0_i32_0 = arith.constant 0 : i32
    %c0_i32_1 = arith.constant 0 : i32
    %c0_i32_2 = arith.constant 0 : i32
    return %c0_i32, %c0_i32_0, %c0_i32_1 : i32, i32, i32
  }
  func.func @transform_5(%arg0: i32, %arg1: i32) -> (i32, i32) {
    %c0_i32 = arith.constant 0 : i32
    %c0_i32_0 = arith.constant 0 : i32
    %c0_i32_1 = arith.constant 0 : i32
    return %c0_i32, %c0_i32_0 : i32, i32
  }
  func.func @transform_6(%arg0: i32, %arg1: i32) -> (i32, i32) {
    %c0_i32 = arith.constant 0 : i32
    %c0_i32_0 = arith.constant 0 : i32
    %c0_i32_1 = arith.constant 0 : i32
    return %c0_i32, %c0_i32_0 : i32, i32
  }
  func.func @transform_7(%arg0: i32, %arg1: i32) -> (i32, i32) {
    %c0_i32 = arith.constant 0 : i32
    %c0_i32_0 = arith.constant 0 : i32
    %c0_i32_1 = arith.constant 0 : i32
    return %c0_i32, %c0_i32_0 : i32, i32
  }
  func.func @transform_8(%arg0: i32, %arg1: i32) -> (i32, i32, i32, i32) {
    %c0_i32 = arith.constant 0 : i32
    %c0_i32_0 = arith.constant 0 : i32
    %c0_i32_1 = arith.constant 0 : i32
    return %arg0, %arg1, %c0_i32, %c0_i32_0 : i32, i32, i32, i32
  }
}

</mosaic_0001>

<llo_original>
// kernel: bottleneck_forward.1
$region0: #{bottleneck_forward.1}
  #allocation0 [shape = 'u32[]', space=smem, size = 0x4, offset = 0x4, fixed_abs, tag = 'smem constant byte address 0x4 - core index']
  #allocation1 [shape = 'u32[144,128]{1,0:T(1,128)}', space=vmem, size = 0x12000, scoped, tag = 'internal scratch']
  #allocation2 [shape = 'bf16[4,16,128]{2,1,0:T(16,128)(2,1)}', space=vmem, size = 0x4000, scoped, tag = 'scratch operand']
  #allocation3 [shape = 'bf16[8,16,32]{2,1,0:T(16,128)(2,1)}', space=vmem, size = 0x8000, scoped, tag = 'scratch operand']
  #allocation4 [shape = 's32[2]{0}', space=sflag, size = 0x8, scoped, tag = 'scratch operand']
  #allocation7 [shape = 's32[]', space=sflag, size = 0x4, offset = 0, fixed_abs, tag = 'sflag constant byte address 0x0 - dummy sync flag']
  #allocation8 [shape = 's32[]', space=sflag, size = 0x4, offset = 0, fixed_abs, tag = 'sflag constant byte address 0x0 - dummy sync flag']
  %s0 = inlined_call_operand.vmem [shape: bf16[2,16,16,128], index: 0, kind: input, shape index: {}, may-alias: {0,1}]
  %s1 = inlined_call_operand.vmem [shape: bf16[2,16,16,128], index: 1, kind: input, shape index: {}, may-alias: {0,1}]
  %s2 = inlined_call_operand.vmem [shape: bf16[128,32], index: 2, kind: input, shape index: {}]
  %s3 = inlined_call_operand.vmem [shape: f32[1,32], index: 3, kind: input, shape index: {}]
  %s4 = inlined_call_operand.vmem [shape: bf16[9,32,32], index: 4, kind: input, shape index: {}]
  %s5 = inlined_call_operand.vmem [shape: f32[1,32], index: 5, kind: input, shape index: {}]
  %s6 = inlined_call_operand.vmem [shape: bf16[32,128], index: 6, kind: input, shape index: {}]
  %s7 = inlined_call_operand.vmem [shape: f32[1,128], index: 7, kind: input, shape index: {}]
  %s8 = inlined_call_operand.hbm [shape: bf16[2,16,16,128], index: 8, kind: output, shape index: {}]
  %s9 = sld [smem:[#allocation0]]
  $region137: #{bottleneck_forward.1} parent=0
    _
  %s11 = ssub.s32 1, %s9
  %s12 = scalar_select 0, %s11, %s9
  $region1: #{bottleneck_forward.1} parent=0
    #allocation5 [shape = 'u8[32768]{0}', space=vmem, size = 0x8000, scoped, tag = 'output window, operand 0']
    #allocation6 [shape = 's32[2]{0}', space=sflag, size = 0x8, scoped, tag = 'scoped memory for bottleneck_forward.1']
    %13 = vsyncpa [#allocation6], 0
    %s14 = scalar_lea.sflag [#allocation6], 1
    %15 = vsyncpa %s14, 0
    loop: start=0, step=1, limit=10
    $region2: #{bottleneck_forward.1} parent=1 // loop_pre_header
      _
    $region3: #{bottleneck_forward.1} parent=1 // loop_header
      %s17 = sphi 0, %s21
      %p18 = scmp.ge.s32.totalorder %s17, 10
      %s24 = sphi 0, %s36
      %s25 = sphi 0, %s32
      %s26 = sphi 0, %s24
      %s27 = sphi 0, %s25
      %s28 = sphi 0, %s26
      %s29 = sphi 0, %s27
      %s41 = sphi 0, %s43
      %s44 = sphi 0, %s41
      %s45 = sphi 0, %s44
      %s61 = sphi 0, %s45
      %s65 = sphi 0, %s65
      %s67 = sphi 0, %s65
      %s68 = sphi 0, %s67
      %s82 = sphi 0, %s68
      %s86 = sphi 0, %s86
      %s88 = sphi 0, %s86
      %s89 = sphi 0, %s88
      %s103 = sphi 0, %s89
      %s107 = sphi 0, %s107
      %s109 = sphi 0, %s107
      %s110 = sphi 0, %s109
      %s124 = sphi 0, %s110
      %s128 = sphi 0, %s128
      %s130 = sphi 0, %s128
      %s131 = sphi 0, %s130
      %s145 = sphi 0, %s131
      %s149 = sphi 0, %s149
      %s151 = sphi 0, %s149
      %s152 = sphi 0, %s151
      %s166 = sphi 0, %s152
      %s170 = sphi 0, %s170
      %s172 = sphi 0, %s170
      %s173 = sphi 0, %s172
      %s187 = sphi 0, %s173
      %s195 = sphi 0, %s197
      %s198 = sphi 0, %s195
      %s199 = sphi 0, %s198
      %s215 = sphi 0, %s199
    $region4: #{bottleneck_forward.1} parent=1 // loop_header_branch
      %20 = sbr.rel (%p18) target = $region8
    $region5: #{bottleneck_forward.1} parent=1 // loop_body
      %s22 = ssub.s32 %s17, 1
      %s23 = ssub.s32 %s17, 2
      %s30 = sadd.s32 1, %s25
      %p31 = scmp.ge.s32.totalorder %s30, 4
      %s32 = scalar_select %p31, 0, %s30
      %s33 = sadd.s32 1, %s24
      %s34 = scalar_select %p31, %s33, %s24
      %p35 = scmp.ge.s32.totalorder %s34, 2
      %s36 = scalar_select %p35, 0, %s34
      %s37 = ssub.s32 %s24, %s36
      %s38 = ssub.s32 %s25, %s32
      %s39 = sor.u32 %s37, %s38
      %p40 = scmp.eq.s32.totalorder %s39, 0
      %s42 = sadd.s32 %s41, 1
      %s43 = scalar_select %p40, %s41, %s42
      %p46 = pneg %p40
      %p47 = scmp.eq.s32.totalorder %s17, 7
      %p48 = por %p46, %p47
      %p49 = scmp.ne.s32.totalorder %s41, %s44
      %p50 = scmp.eq.s32.totalorder %s17, 0
      %p51 = por %p49, %p50
      %p52 = scmp.ne.s32.totalorder %s41, %s44
      %p53 = scmp.eq.s32.totalorder %s22, 7
      %p54 = por %p52, %p53
      %p55 = scmp.ne.s32.totalorder %s44, %s45
      %p56 = scmp.eq.s32.totalorder %s22, 0
      %p57 = por %p55, %p56
      %p58 = scmp.ne.s32.totalorder %s44, %s45
      %p59 = scmp.eq.s32.totalorder %s23, 7
      %p60 = por %p58, %p59
      %p62 = scmp.ne.s32.totalorder %s45, %s61
      %p63 = scmp.eq.s32.totalorder %s23, 0
      %p64 = por %p62, %p63
      %s66 = sadd.s32 %s65, 1
      %p69 = scmp.eq.s32.totalorder %s17, 7
      %p70 = scmp.ne.s32.totalorder %s65, %s67
      %p71 = scmp.eq.s32.totalorder %s17, 0
      %p72 = por %p70, %p71
      %p73 = scmp.ne.s32.totalorder %s65, %s67
      %p74 = scmp.eq.s32.totalorder %s22, 7
      %p75 = por %p73, %p74
      %p76 = scmp.ne.s32.totalorder %s67, %s68
      %p77 = scmp.eq.s32.totalorder %s22, 0
      %p78 = por %p76, %p77
      %p79 = scmp.ne.s32.totalorder %s67, %s68
      %p80 = scmp.eq.s32.totalorder %s23, 7
      %p81 = por %p79, %p80
      %p83 = scmp.ne.s32.totalorder %s68, %s82
      %p84 = scmp.eq.s32.totalorder %s23, 0
      %p85 = por %p83, %p84
      %s87 = sadd.s32 %s86, 1
      %p90 = scmp.eq.s32.totalorder %s17, 7
      %p91 = scmp.ne.s32.totalorder %s86, %s88
      %p92 = scmp.eq.s32.totalorder %s17, 0
      %p93 = por %p91, %p92
      %p94 = scmp.ne.s32.totalorder %s86, %s88
      %p95 = scmp.eq.s32.totalorder %s22, 7
      %p96 = por %p94, %p95
      %p97 = scmp.ne.s32.totalorder %s88, %s89
      %p98 = scmp.eq.s32.totalorder %s22, 0
      %p99 = por %p97, %p98
      %p100 = scmp.ne.s32.totalorder %s88, %s89
      %p101 = scmp.eq.s32.totalorder %s23, 7
      %p102 = por %p100, %p101
      %p104 = scmp.ne.s32.totalorder %s89, %s103
      %p105 = scmp.eq.s32.totalorder %s23, 0
      %p106 = por %p104, %p105
      %s108 = sadd.s32 %s107, 1
      %p111 = scmp.eq.s32.totalorder %s17, 7
      %p112 = scmp.ne.s32.totalorder %s107, %s109
      %p113 = scmp.eq.s32.totalorder %s17, 0
      %p114 = por %p112, %p113
      %p115 = scmp.ne.s32.totalorder %s107, %s109
      %p116 = scmp.eq.s32.totalorder %s22, 7
      %p117 = por %p115, %p116
      %p118 = scmp.ne.s32.totalorder %s109, %s110
      %p119 = scmp.eq.s32.totalorder %s22, 0
      %p120 = por %p118, %p119
      %p121 = scmp.ne.s32.totalorder %s109, %s110
      %p122 = scmp.eq.s32.totalorder %s23, 7
      %p123 = por %p121, %p122
      %p125 = scmp.ne.s32.totalorder %s110, %s124
      %p126 = scmp.eq.s32.totalorder %s23, 0
      %p127 = por %p125, %p126
      %s129 = sadd.s32 %s128, 1
      %p132 = scmp.eq.s32.totalorder %s17, 7
      %p133 = scmp.ne.s32.totalorder %s128, %s130
      %p134 = scmp.eq.s32.totalorder %s17, 0
      %p135 = por %p133, %p134
      %p136 = scmp.ne.s32.totalorder %s128, %s130
      %p137 = scmp.eq.s32.totalorder %s22, 7
      %p138 = por %p136, %p137
      %p139 = scmp.ne.s32.totalorder %s130, %s131
      %p140 = scmp.eq.s32.totalorder %s22, 0
      %p141 = por %p139, %p140
      %p142 = scmp.ne.s32.totalorder %s130, %s131
      %p143 = scmp.eq.s32.totalorder %s23, 7
      %p144 = por %p142, %p143
      %p146 = scmp.ne.s32.totalorder %s131, %s145
      %p147 = scmp.eq.s32.totalorder %s23, 0
      %p148 = por %p146, %p147
      %s150 = sadd.s32 %s149, 1
      %p153 = scmp.eq.s32.totalorder %s17, 7
      %p154 = scmp.ne.s32.totalorder %s149, %s151
      %p155 = scmp.eq.s32.totalorder %s17, 0
      %p156 = por %p154, %p155
      %p157 = scmp.ne.s32.totalorder %s149, %s151
      %p158 = scmp.eq.s32.totalorder %s22, 7
      %p159 = por %p157, %p158
      %p160 = scmp.ne.s32.totalorder %s151, %s152
      %p161 = scmp.eq.s32.totalorder %s22, 0
      %p162 = por %p160, %p161
      %p163 = scmp.ne.s32.totalorder %s151, %s152
      %p164 = scmp.eq.s32.totalorder %s23, 7
      %p165 = por %p163, %p164
      %p167 = scmp.ne.s32.totalorder %s152, %s166
      %p168 = scmp.eq.s32.totalorder %s23, 0
      %p169 = por %p167, %p168
      %s171 = sadd.s32 %s170, 1
      %p174 = scmp.eq.s32.totalorder %s17, 7
      %p175 = scmp.ne.s32.totalorder %s170, %s172
      %p176 = scmp.eq.s32.totalorder %s17, 0
      %p177 = por %p175, %p176
      %p178 = scmp.ne.s32.totalorder %s170, %s172
      %p179 = scmp.eq.s32.totalorder %s22, 7
      %p180 = por %p178, %p179
      %p181 = scmp.ne.s32.totalorder %s172, %s173
      %p182 = scmp.eq.s32.totalorder %s22, 0
      %p183 = por %p181, %p182
      %p184 = scmp.ne.s32.totalorder %s172, %s173
      %p185 = scmp.eq.s32.totalorder %s23, 7
      %p186 = por %p184, %p185
      %p188 = scmp.ne.s32.totalorder %s173, %s187
      %p189 = scmp.eq.s32.totalorder %s23, 0
      %p190 = por %p188, %p189
      %s191 = ssub.s32 %s24, %s36
      %s192 = ssub.s32 %s25, %s32
      %s193 = sor.u32 %s191, %s192
      %p194 = scmp.eq.s32.totalorder %s193, 0
      %s196 = sadd.s32 %s195, 1
      %s197 = scalar_select %p194, %s195, %s196
      %p200 = pneg %p194
      %p201 = scmp.eq.s32.totalorder %s17, 7
      %p202 = por %p200, %p201
      %p203 = scmp.ne.s32.totalorder %s195, %s198
      %p204 = scmp.eq.s32.totalorder %s17, 0
      %p205 = por %p203, %p204
      %p206 = scmp.ne.s32.totalorder %s195, %s198
      %p207 = scmp.eq.s32.totalorder %s22, 7
      %p208 = por %p206, %p207
      %p209 = scmp.ne.s32.totalorder %s198, %s199
      %p210 = scmp.eq.s32.totalorder %s22, 0
      %p211 = por %p209, %p210
      %p212 = scmp.ne.s32.totalorder %s198, %s199
      %p213 = scmp.eq.s32.totalorder %s23, 7
      %p214 = por %p212, %p213
      %p216 = scmp.ne.s32.totalorder %s199, %s215
      %p217 = scmp.eq.s32.totalorder %s23, 0
      %p218 = por %p216, %p217
      %p219 = scmp.le.s32.totalorder 1, %s17
      %p220 = scmp.lt.s32.totalorder %s17, 9
      %p221 = pnand %p219, %p220
      %p222 = pneg %p221
      // Predicated region
      $region9: #{bottleneck_forward.1} parent=5 // pred_check
        _
      $region10: #{bottleneck_forward.1} parent=5 // pred_check_branch
        %224 = sbr.rel (%p221) target = $region12
      $region11: #{bottleneck_forward.1} parent=5 // pred_region
        %s225 = ssub.s32 %s17, 1
        // Predicated region
        $region13: #{bottleneck_forward.1} parent=11 // pred_check
          %p226 = pneg %p78
        $region14: #{bottleneck_forward.1} parent=11 // pred_check_branch
          %228 = sbr.rel (%p226) target = $region16
        $region15: #{bottleneck_forward.1} parent=11 // pred_region
          _
        $region16: #{bottleneck_forward.1} parent=11 // pred_fallthru
          _
        // Predicated region
        $region17: #{bottleneck_forward.1} parent=11 // pred_check
          %p229 = pneg %p99
        $region18: #{bottleneck_forward.1} parent=11 // pred_check_branch
          %231 = sbr.rel (%p229) target = $region20
        $region19: #{bottleneck_forward.1} parent=11 // pred_region
          _
        $region20: #{bottleneck_forward.1} parent=11 // pred_fallthru
          _
        // Predicated region
        $region21: #{bottleneck_forward.1} parent=11 // pred_check
          %p232 = pneg %p120
        $region22: #{bottleneck_forward.1} parent=11 // pred_check_branch
          %234 = sbr.rel (%p232) target = $region24
        $region23: #{bottleneck_forward.1} parent=11 // pred_region
          _
        $region24: #{bottleneck_forward.1} parent=11 // pred_fallthru
          _
        // Predicated region
        $region25: #{bottleneck_forward.1} parent=11 // pred_check
          %p235 = pneg %p141
        $region26: #{bottleneck_forward.1} parent=11 // pred_check_branch
          %237 = sbr.rel (%p235) target = $region28
        $region27: #{bottleneck_forward.1} parent=11 // pred_region
          _
        $region28: #{bottleneck_forward.1} parent=11 // pred_fallthru
          _
        // Predicated region
        $region29: #{bottleneck_forward.1} parent=11 // pred_check
          %p238 = pneg %p162
        $region30: #{bottleneck_forward.1} parent=11 // pred_check_branch
          %240 = sbr.rel (%p238) target = $region32
        $region31: #{bottleneck_forward.1} parent=11 // pred_region
          _
        $region32: #{bottleneck_forward.1} parent=11 // pred_fallthru
          _
        // Predicated region
        $region33: #{bottleneck_forward.1} parent=11 // pred_check
          %p241 = pneg %p183
        $region34: #{bottleneck_forward.1} parent=11 // pred_check_branch
          %243 = sbr.rel (%p241) target = $region36
        $region35: #{bottleneck_forward.1} parent=11 // pred_region
          _
        $region36: #{bottleneck_forward.1} parent=11 // pred_fallthru
          _
      $region12: #{bottleneck_forward.1} parent=5 // pred_fallthru
        _
      %p244 = scmp.lt.s32.totalorder %s17, 8
      // Predicated region
      $region37: #{bottleneck_forward.1} parent=5 // pred_check
        %p245 = pneg %p244
      $region38: #{bottleneck_forward.1} parent=5 // pred_check_branch
        %247 = sbr.rel (%p245) target = $region40
      $region39: #{bottleneck_forward.1} parent=5 // pred_region
        // Predicated region
        $region41: #{bottleneck_forward.1} parent=39 // pred_check
          %p248 = pneg %p51
        $region42: #{bottleneck_forward.1} parent=39 // pred_check_branch
          %250 = sbr.rel (%p248) target = $region44
        $region43: #{bottleneck_forward.1} parent=39 // pred_region
          %s251 = smul.u32 4, %s25
          %p252 = scmp.lt.s32.totalorder %s24, 1
          %s253 = scalar_select %p252, %s24, 1
          %p254 = scmp.lt.s32.totalorder %s251, 15
          %s255 = scalar_select %p254, %s251, 15
          %s256 = smul.addr %s255, 2
          %s257 = smul.addr %s253, 32
          %s258 = sadd.s32 %s256, %s257
          %s259 = smul.addr %s258, 4
          %s260 = scalar_lea.vmem %s0, %s259
          %s261 = smul.u32 4, %s25
        $region44: #{bottleneck_forward.1} parent=39 // pred_fallthru
          _
      $region40: #{bottleneck_forward.1} parent=5 // pred_fallthru
        _
      %p262 = scmp.le.s32.totalorder 1, %s17
      %p263 = scmp.lt.s32.totalorder %s17, 9
      %p264 = pnand %p262, %p263
      %p265 = pneg %p264
      // Predicated region
      $region45: #{bottleneck_forward.1} parent=5 // pred_check
        _
      $region46: #{bottleneck_forward.1} parent=5 // pred_check_branch
        %267 = sbr.rel (%p264) target = $region48
      $region47: #{bottleneck_forward.1} parent=5 // pred_region
        %s268 = ssub.s32 %s17, 1
        %s269 = smul.u32 4, %s27
        %p270 = scmp.lt.s32.totalorder %s26, 1
        %s271 = scalar_select %p270, %s26, 1
        %p272 = scmp.lt.s32.totalorder %s269, 15
        %s273 = scalar_select %p272, %s269, 15
        %s274 = smul.addr %s273, 2
        %s275 = smul.addr %s271, 32
        %s276 = sadd.s32 %s274, %s275
        %s277 = smul.addr %s276, 4
        %s278 = scalar_lea.vmem %s0, %s277
        %p279 = pneg %p57
        %p280 = pneg %p54
        %p281 = pneg %p78
        %p282 = pneg %p75
        %p283 = pneg %p99
        %p284 = pneg %p96
        %p285 = pneg %p120
        %p286 = pneg %p117
        %p287 = pneg %p141
        %p288 = pneg %p138
        %p289 = pneg %p162
        %p290 = pneg %p159
        %p291 = pneg %p183
        %p292 = pneg %p180
        %p293 = pneg %p211
        %p294 = pneg %p208
        %s295 = sand.u32 %s198, 1
        %s296 = scalar_lea.sflag [#allocation6], %s295
        %s297 = sand.u32 %s198, 1
        %s298 = smul.addr %s297, 32
        %s299 = scalar_lea.vmem [#allocation5], %s298
        %s300 = smul.u32 4, %s27
        %p301 = scmp.lt.s32.totalorder %s26, 1
        %s302 = scalar_select %p301, %s26, 1
        %p303 = scmp.lt.s32.totalorder %s300, 15
        %s304 = scalar_select %p303, %s300, 15
        %s305 = smul.addr %s304, 2
        %s306 = smul.addr %s302, 32
        %s307 = sadd.s32 %s305, %s306
        %s308 = smul.addr %s307, 4
        %s309 = scalar_lea.vmem %s0, %s308
        %s310 = smul.u32 4, %s27
        %s311 = smul.u32 4, %s27
        %s313 = smul.u32 %s27, 4
        %s314 = ssub.s32 %s313, 2
        %p315 = scmp.gt.s32.totalorder %s314, 0
        %s316 = scalar_select %p315, %s314, 0
        %s317 = sadd.s32 %s313, 4
        %p318 = scmp.lt.s32.totalorder %s317, 14
        %s319 = scalar_select %p318, %s317, 14
        %s320 = smul.u32 %s316, 2
        %s321 = smul.u32 %s26, 32
        %s322 = sadd.s32 %s320, %s321
        %s323 = smul.addr %s322, 4
        %s324 = scalar_lea.vmem %s1, %s323
        %p326 = scmp.lt.u32.totalorder 16, 8
        %p327 = pneg %p326
        // Predicated region
        $region49: #{bottleneck_forward.1} parent=47 // pred_check
          _
        $region50: #{bottleneck_forward.1} parent=47 // pred_check_branch
          %329 = sbr.rel (%p326) target = $region52
        $region51: #{bottleneck_forward.1} parent=47 // pred_region
          %s344 = sand.u32 16, 7
          %p345 = scmp.eq.s32.totalorder %s344, 0
          // Predicated region
          $region64: #{bottleneck_forward.1} parent=51 // pred_check
            %p346 = pneg %p345
          $region65: #{bottleneck_forward.1} parent=51 // pred_check_branch
            %348 = sbr.rel (%p346) target = $region67
          $region66: #{bottleneck_forward.1} parent=51 // pred_region
            loop: start=0, step=1, limit=1
            $region68: #{bottleneck_forward.1} parent=66 // loop_pre_header
              _
            $region69: #{bottleneck_forward.1} parent=66 // loop_header
              %s350 = sphi 0, %s354
              %p351 = scmp.ge.s32.totalorder %s350, 1
              %s355 = sphi %s324, %s324
              %s356 = sphi [#allocation2], [#allocation2]
            $region70: #{bottleneck_forward.1} parent=66 // loop_header_branch
              %353 = sbr.rel (%p351) target = $region74
            $region71: #{bottleneck_forward.1} parent=66 // loop_body
              %v357 = vld [vmem:[%s355] sm:$0xff]
              %358 = vst [vmem:[%s356] sm:$0xff] %v357
              %v359 = vld [vmem:[%s355 + $0x8] sm:$0xff]
              %360 = vst [vmem:[%s356 + $0x8] sm:$0xff] %v359
            $region72: #{bottleneck_forward.1} parent=66 // loop_footer
              %s354 = sadd.s32 1, %s350
            $region73: #{bottleneck_forward.1} parent=66 // loop_footer_branch
              %349 = sbr.rel target = $region69
            $region74: #{bottleneck_forward.1} parent=66 // loop_exit
              _
          $region67: #{bottleneck_forward.1} parent=51 // pred_fallthru
            _
          %p361 = pneg %p345
          // Predicated region
          $region75: #{bottleneck_forward.1} parent=51 // pred_check
            _
          $region76: #{bottleneck_forward.1} parent=51 // pred_check_branch
            %363 = sbr.rel (%p345) target = $region78
          $region77: #{bottleneck_forward.1} parent=51 // pred_region
            %s364 = sand.u32 16, 7
          $region78: #{bottleneck_forward.1} parent=51 // pred_fallthru
            _
        $region52: #{bottleneck_forward.1} parent=47 // pred_fallthru
          _
        // Predicated region
        $region53: #{bottleneck_forward.1} parent=47 // pred_check
          %p330 = pneg %p326
        $region54: #{bottleneck_forward.1} parent=47 // pred_check_branch
          %332 = sbr.rel (%p330) target = $region56
        $region55: #{bottleneck_forward.1} parent=47 // pred_region
          %s333 = sshllo.u32 0, 16
          loop: start=0, step=1, limit=1
          $region57: #{bottleneck_forward.1} parent=55 // loop_pre_header
            _
          $region58: #{bottleneck_forward.1} parent=55 // loop_header
            %s335 = sphi 0, %s339
            %p336 = scmp.ge.s32.totalorder %s335, 1
            %s340 = sphi %s324, %s324
            %s341 = sphi [#allocation2], [#allocation2]
          $region59: #{bottleneck_forward.1} parent=55 // loop_header_branch
            %338 = sbr.rel (%p336) target = $region63
          $region60: #{bottleneck_forward.1} parent=55 // loop_body
            %v342 = vld [vmem:[%s340] sm:%s333]
            %343 = vst [vmem:[%s341] sm:%s333] %v342
          $region61: #{bottleneck_forward.1} parent=55 // loop_footer
            %s339 = sadd.s32 1, %s335
          $region62: #{bottleneck_forward.1} parent=55 // loop_footer_branch
            %334 = sbr.rel target = $region58
          $region63: #{bottleneck_forward.1} parent=55 // loop_exit
            _
        $region56: #{bottleneck_forward.1} parent=47 // pred_fallthru
          _
        // Predicated region
        $region79: #{bottleneck_forward.1} parent=47 // pred_check
          _
        $region80: #{bottleneck_forward.1} parent=47 // pred_check_branch
          %367 = sbr.rel (0) target = $region82
        $region81: #{bottleneck_forward.1} parent=47 // pred_region
          %368 = vsyncadd [#allocation4], 256
        $region82: #{bottleneck_forward.1} parent=47 // pred_fallthru
          _
        %s369 = smul.u32 %s319, 2
        %s370 = sadd.s32 %s369, %s321
        %s371 = smul.addr %s370, 4
        %s372 = scalar_lea.vmem %s1, %s371
        %s373 = scalar_lea.vmem [#allocation2], 16
        %s374 = scalar_lea.sflag [#allocation4], 1
        %p376 = scmp.lt.u32.totalorder 16, 8
        %p377 = pneg %p376
        // Predicated region
        $region83: #{bottleneck_forward.1} parent=47 // pred_check
          _
        $region84: #{bottleneck_forward.1} parent=47 // pred_check_branch
          %379 = sbr.rel (%p376) target = $region86
        $region85: #{bottleneck_forward.1} parent=47 // pred_region
          %s394 = sand.u32 16, 7
          %p395 = scmp.eq.s32.totalorder %s394, 0
          // Predicated region
          $region98: #{bottleneck_forward.1} parent=85 // pred_check
            %p396 = pneg %p395
          $region99: #{bottleneck_forward.1} parent=85 // pred_check_branch
            %398 = sbr.rel (%p396) target = $region101
          $region100: #{bottleneck_forward.1} parent=85 // pred_region
            loop: start=0, step=1, limit=1
            $region102: #{bottleneck_forward.1} parent=100 // loop_pre_header
              _
            $region103: #{bottleneck_forward.1} parent=100 // loop_header
              %s400 = sphi 0, %s404
              %p401 = scmp.ge.s32.totalorder %s400, 1
              %s405 = sphi %s372, %s372
              %s406 = sphi %s373, %s373
            $region104: #{bottleneck_forward.1} parent=100 // loop_header_branch
              %403 = sbr.rel (%p401) target = $region108
            $region105: #{bottleneck_forward.1} parent=100 // loop_body
              %v407 = vld [vmem:[%s405] sm:$0xff]
              %408 = vst [vmem:[%s406] sm:$0xff] %v407
              %v409 = vld [vmem:[%s405 + $0x8] sm:$0xff]
              %410 = vst [vmem:[%s406 + $0x8] sm:$0xff] %v409
            $region106: #{bottleneck_forward.1} parent=100 // loop_footer
              %s404 = sadd.s32 1, %s400
            $region107: #{bottleneck_forward.1} parent=100 // loop_footer_branch
              %399 = sbr.rel target = $region103
            $region108: #{bottleneck_forward.1} parent=100 // loop_exit
              _
          $region101: #{bottleneck_forward.1} parent=85 // pred_fallthru
            _
          %p411 = pneg %p395
          // Predicated region
          $region109: #{bottleneck_forward.1} parent=85 // pred_check
            _
          $region110: #{bottleneck_forward.1} parent=85 // pred_check_branch
            %413 = sbr.rel (%p395) target = $region112
          $region111: #{bottleneck_forward.1} parent=85 // pred_region
            %s414 = sand.u32 16, 7
          $region112: #{bottleneck_forward.1} parent=85 // pred_fallthru
            _
        $region86: #{bottleneck_forward.1} parent=47 // pred_fallthru
          _
        // Predicated region
        $region87: #{bottleneck_forward.1} parent=47 // pred_check
          %p380 = pneg %p376
        $region88: #{bottleneck_forward.1} parent=47 // pred_check_branch
          %382 = sbr.rel (%p380) target = $region90
        $region89: #{bottleneck_forward.1} parent=47 // pred_region
          %s383 = sshllo.u32 0, 16
          loop: start=0, step=1, limit=1
          $region91: #{bottleneck_forward.1} parent=89 // loop_pre_header
            _
          $region92: #{bottleneck_forward.1} parent=89 // loop_header
            %s385 = sphi 0, %s389
            %p386 = scmp.ge.s32.totalorder %s385, 1
            %s390 = sphi %s372, %s372
            %s391 = sphi %s373, %s373
          $region93: #{bottleneck_forward.1} parent=89 // loop_header_branch
            %388 = sbr.rel (%p386) target = $region97
          $region94: #{bottleneck_forward.1} parent=89 // loop_body
            %v392 = vld [vmem:[%s390] sm:%s383]
            %393 = vst [vmem:[%s391] sm:%s383] %v392
          $region95: #{bottleneck_forward.1} parent=89 // loop_footer
            %s389 = sadd.s32 1, %s385
          $region96: #{bottleneck_forward.1} parent=89 // loop_footer_branch
            %384 = sbr.rel target = $region92
          $region97: #{bottleneck_forward.1} parent=89 // loop_exit
            _
        $region90: #{bottleneck_forward.1} parent=47 // pred_fallthru
          _
        // Predicated region
        $region113: #{bottleneck_forward.1} parent=47 // pred_check
          _
        $region114: #{bottleneck_forward.1} parent=47 // pred_check_branch
          %417 = sbr.rel (0) target = $region116
        $region115: #{bottleneck_forward.1} parent=47 // pred_region
          %418 = vsyncadd %s374, 256
        $region116: #{bottleneck_forward.1} parent=47 // pred_fallthru
          _
        %v419 = vld [vmem:[%s309] sm:$0xf]
        %v420 = vld [vmem:[%s309 + $0x4] sm:$0xf]
        %v421 = vld [vmem:[%s309 + $0x8] sm:$0xf]
        %v422 = vld [vmem:[%s309 + $0xc] sm:$0xf]
        %v423 = vld [vmem:[%s309 + $0x10] sm:$0xf]
        %v424 = vld [vmem:[%s309 + $0x14] sm:$0xf]
        %v425 = vld [vmem:[%s309 + $0x18] sm:$0xf]
        %v426 = vld [vmem:[%s309 + $0x1c] sm:$0xf]
        %v427 = vld [vmem:[%s2] sm:$0xf]
        %v428 = vld [vmem:[%s2 + $0x4] sm:$0xf]
        %v429 = vld [vmem:[%s2 + $0x8] sm:$0xf]
        %v430 = vld [vmem:[%s2 + $0xc] sm:$0xf]
        %v431 = vld [vmem:[%s2 + $0x10] sm:$0xf]
        %v432 = vld [vmem:[%s2 + $0x14] sm:$0xf]
        %v433 = vld [vmem:[%s2 + $0x18] sm:$0xf]
        %v434 = vld [vmem:[%s2 + $0x1c] sm:$0xf]
        %v435 = vld [vmem:[%s2 + $0x20] sm:$0xf]
        %v436 = vld [vmem:[%s2 + $0x24] sm:$0xf]
        %v437 = vld [vmem:[%s2 + $0x28] sm:$0xf]
        %v438 = vld [vmem:[%s2 + $0x2c] sm:$0xf]
        %v439 = vld [vmem:[%s2 + $0x30] sm:$0xf]
        %v440 = vld [vmem:[%s2 + $0x34] sm:$0xf]
        %v441 = vld [vmem:[%s2 + $0x38] sm:$0xf]
        %v442 = vld [vmem:[%s2 + $0x3c] sm:$0xf]
        %v443 = vld [vmem:[%s3] sm:$0x1]
        %v445 = vlaneseq
        %v446 = vshrl.u32 %v445, 7
        %v447 = vsub.s32 0, %v446
        %v448 = vrot.slane %v443, %v447
        %v458 = vunpack.c.l.b16 %v419
        %v459 = vunpack.c.l.b16 %v420
        %v460 = vunpack.c.l.b16 %v421
        %v461 = vunpack.c.l.b16 %v422
        %v462 = vunpack.c.l.b16 %v423
        %v463 = vunpack.c.l.b16 %v424
        %v464 = vunpack.c.l.b16 %v425
        %v465 = vunpack.c.l.b16 %v426
        %v466 = vpack.c.b16 %v459, %v458
        %v467 = vpack.c.b16 %v461, %v460
        %v468 = vpack.c.b16 %v463, %v462
        %v469 = vpack.c.b16 %v465, %v464
        %v490 = vunpack.c.l.b16 %v427
        %v491 = vunpack.c.l.b16 %v428
        %v492 = vunpack.c.l.b16 %v429
        %v493 = vunpack.c.l.b16 %v430
        %v494 = vunpack.c.l.b16 %v431
        %v495 = vunpack.c.l.b16 %v432
        %v496 = vunpack.c.l.b16 %v433
        %v497 = vunpack.c.l.b16 %v434
        %v498 = vunpack.c.l.b16 %v435
        %v499 = vunpack.c.l.b16 %v436
        %v500 = vunpack.c.l.b16 %v437
        %v501 = vunpack.c.l.b16 %v438
        %v502 = vunpack.c.l.b16 %v439
        %v503 = vunpack.c.l.b16 %v440
        %v504 = vunpack.c.l.b16 %v441
        %v505 = vunpack.c.l.b16 %v442
        %v506 = vpack.c.b16 %v491, %v490
        %v507 = vpack.c.b16 %v493, %v492
        %v508 = vpack.c.b16 %v495, %v494
        %v509 = vpack.c.b16 %v497, %v496
        %v510 = vpack.c.b16 %v499, %v498
        %v511 = vpack.c.b16 %v501, %v500
        %v512 = vpack.c.b16 %v503, %v502
        %v513 = vpack.c.b16 %v505, %v504
        %522 = vmatprep.subr.bf16.mxu0 0
        %523 = vmatpush1.bf16.msra.mxu0 %v506
        %524 = vmatprep.subr.bf16.mxu0 0
        %525 = vmatpush1.bf16.msra.mxu0 %v507
        %526 = vmatprep.subr.bf16.mxu0 0
        %527 = vmatpush1.bf16.msra.mxu0 %v508
        %528 = vmatprep.subr.bf16.mxu0 0
        %529 = vmatpush1.bf16.msra.mxu0 %v509
        %530 = vmatprep.subr.bf16.mxu0 0
        %531 = vmatpush1.bf16.msra.mxu0 %v510
        %532 = vmatprep.subr.bf16.mxu0 0
        %533 = vmatpush1.bf16.msra.mxu0 %v511
        %534 = vmatprep.subr.bf16.mxu0 0
        %535 = vmatpush1.bf16.msra.mxu0 %v512
        %536 = vmatprep.subr.bf16.mxu0 0
        %537 = vmatpush1.bf16.msra.mxu0 %v513
        %538 = vmatprep.subr.bf16.mxu0 0
        %539 = vmatpush1.bf16.msra.mxu0 0
        %540 = vmatprep.subr.bf16.mxu0 0
        %541 = vmatpush1.bf16.msra.mxu0 0
        %542 = vmatprep.subr.bf16.mxu0 0
        %543 = vmatpush1.bf16.msra.mxu0 0
        %544 = vmatprep.subr.bf16.mxu0 0
        %545 = vmatpush1.bf16.msra.mxu0 0
        %546 = vmatprep.subr.bf16.mxu0 0
        %547 = vmatpush1.bf16.msra.mxu0 0
        %548 = vmatprep.subr.bf16.mxu0 0
        %549 = vmatpush1.bf16.msra.mxu0 0
        %550 = vmatprep.subr.bf16.mxu0 0
        %551 = vmatpush1.bf16.msra.mxu0 0
        %552 = vmatprep.subr.bf16.mxu0 0
        %553 = vmatpush1.bf16.msra.mxu0 0
        %554 = vmatprep.mubr.bf16.mxu0 0
        %555 = vmatmul.mubr.bf16.gmra.mrb[0].mxu0 %v466
        %v556 = vpop.f32.mrb[0].mxu0
        %v557 = vadd.f32 %v448, %v556
        %v558 = vpop.f32.mrb[0].mxu0
        %v559 = vpop.f32.mrb[0].mxu0
        %v560 = vadd.f32 %v448, %v559
        %v561 = vpop.f32.mrb[0].mxu0
        %562 = vmatprep.mubr.bf16.mxu0 0
        %563 = vmatmul.mubr.bf16.gmra.mrb[0].mxu0 %v467
        %v564 = vpop.f32.mrb[0].mxu0
        %v565 = vadd.f32 %v448, %v564
        %v566 = vpop.f32.mrb[0].mxu0
        %v567 = vpop.f32.mrb[0].mxu0
        %v568 = vadd.f32 %v448, %v567
        %v569 = vpop.f32.mrb[0].mxu0
        %570 = vmatprep.mubr.bf16.mxu0 0
        %571 = vmatmul.mubr.bf16.gmra.mrb[0].mxu0 %v468
        %v572 = vpop.f32.mrb[0].mxu0
        %v573 = vadd.f32 %v448, %v572
        %v574 = vpop.f32.mrb[0].mxu0
        %v575 = vpop.f32.mrb[0].mxu0
        %v576 = vadd.f32 %v448, %v575
        %v577 = vpop.f32.mrb[0].mxu0
        %578 = vmatprep.mubr.bf16.mxu0 0
        %579 = vmatmul.mubr.bf16.gmra.mrb[0].mxu0 %v469
        %v580 = vpop.f32.mrb[0].mxu0
        %v581 = vadd.f32 %v448, %v580
        %v582 = vpop.f32.mrb[0].mxu0
        %v583 = vpop.f32.mrb[0].mxu0
        %v584 = vadd.f32 %v448, %v583
        %v585 = vpop.f32.mrb[0].mxu0
        %586 = vdwg.mxu0
        %v587 = vmax.f32 %v557, 0.0
        %v588 = vmax.f32 %v560, 0.0
        %v589 = vmax.f32 %v565, 0.0
        %v590 = vmax.f32 %v568, 0.0
        %v591 = vmax.f32 %v573, 0.0
        %v592 = vmax.f32 %v576, 0.0
        %v593 = vmax.f32 %v581, 0.0
        %v594 = vmax.f32 %v584, 0.0
        %v595 = vpack.c.bf16 %v588, %v587
        %v596 = vpack.c.bf16 %v590, %v589
        %v597 = vpack.c.bf16 %v592, %v591
        %v598 = vpack.c.bf16 %v594, %v593
        %s599 = scalar_lea.vmem [#allocation3], 16
        %vm600 = vcmask 261120
        %601 = vst.msk [vmem:[%s599] sm:$0xff] %vm600, %v595
        %602 = vst.msk [vmem:[%s599 + $0x8] sm:$0xff] %vm600, %v596
        %603 = vst.msk [vmem:[%s599 + $0x10] sm:$0xff] %vm600, %v597
        %604 = vst.msk [vmem:[%s599 + $0x18] sm:$0xff] %vm600, %v598
        %s605 = smul.u32 4, 2
        %s606 = smul.u32 %s605, 2
        %s607 = smul.u32 %s606, 1
        %s608 = sshll.u32 %s607, 4
        %609 = dma.done [#allocation4], %s608
        %s610 = sshll.u32 %s607, 4
        %611 = dma.done %s374, %s610
        %v612 = vld [vmem:[#allocation2] sm:$0xff]
        %v613 = vld [vmem:[#allocation2 + $0x8] sm:$0xff]
        %v614 = vld [vmem:[#allocation2 + $0x10] sm:$0xff]
        %v615 = vld [vmem:[#allocation2 + $0x18] sm:$0xff]
        %v616 = vld [vmem:[%s2] sm:$0xf]
        %v617 = vld [vmem:[%s2 + $0x4] sm:$0xf]
        %v618 = vld [vmem:[%s2 + $0x8] sm:$0xf]
        %v619 = vld [vmem:[%s2 + $0xc] sm:$0xf]
        %v620 = vld [vmem:[%s2 + $0x10] sm:$0xf]
        %v621 = vld [vmem:[%s2 + $0x14] sm:$0xf]
        %v622 = vld [vmem:[%s2 + $0x18] sm:$0xf]
        %v623 = vld [vmem:[%s2 + $0x1c] sm:$0xf]
        %v624 = vld [vmem:[%s2 + $0x20] sm:$0xf]
        %v625 = vld [vmem:[%s2 + $0x24] sm:$0xf]
        %v626 = vld [vmem:[%s2 + $0x28] sm:$0xf]
        %v627 = vld [vmem:[%s2 + $0x2c] sm:$0xf]
        %v628 = vld [vmem:[%s2 + $0x30] sm:$0xf]
        %v629 = vld [vmem:[%s2 + $0x34] sm:$0xf]
        %v630 = vld [vmem:[%s2 + $0x38] sm:$0xf]
        %v631 = vld [vmem:[%s2 + $0x3c] sm:$0xf]
        %v632 = vld [vmem:[%s3] sm:$0x1]
        %v634 = vlaneseq
        %v635 = vshrl.u32 %v634, 7
        %v636 = vsub.s32 0, %v635
        %v637 = vrot.slane %v632, %v636
        %v655 = vunpack.c.l.b16 %v616
        %v656 = vunpack.c.l.b16 %v617
        %v657 = vunpack.c.l.b16 %v618
        %v658 = vunpack.c.l.b16 %v619
        %v659 = vunpack.c.l.b16 %v620
        %v660 = vunpack.c.l.b16 %v621
        %v661 = vunpack.c.l.b16 %v622
        %v662 = vunpack.c.l.b16 %v623
        %v663 = vunpack.c.l.b16 %v624
        %v664 = vunpack.c.l.b16 %v625
        %v665 = vunpack.c.l.b16 %v626
        %v666 = vunpack.c.l.b16 %v627
        %v667 = vunpack.c.l.b16 %v628
        %v668 = vunpack.c.l.b16 %v629
        %v669 = vunpack.c.l.b16 %v630
        %v670 = vunpack.c.l.b16 %v631
        %v671 = vpack.c.b16 %v656, %v655
        %v672 = vpack.c.b16 %v658, %v657
        %v673 = vpack.c.b16 %v660, %v659
        %v674 = vpack.c.b16 %v662, %v661
        %v675 = vpack.c.b16 %v664, %v663
        %v676 = vpack.c.b16 %v666, %v665
        %v677 = vpack.c.b16 %v668, %v667
        %v678 = vpack.c.b16 %v670, %v669
        %687 = vmatprep.subr.bf16.mxu0 0
        %688 = vmatpush1.bf16.msra.mxu0 %v671
        %689 = vmatprep.subr.bf16.mxu0 0
        %690 = vmatpush1.bf16.msra.mxu0 %v672
        %691 = vmatprep.subr.bf16.mxu0 0
        %692 = vmatpush1.bf16.msra.mxu0 %v673
        %693 = vmatprep.subr.bf16.mxu0 0
        %694 = vmatpush1.bf16.msra.mxu0 %v674
        %695 = vmatprep.subr.bf16.mxu0 0
        %696 = vmatpush1.bf16.msra.mxu0 %v675
        %697 = vmatprep.subr.bf16.mxu0 0
        %698 = vmatpush1.bf16.msra.mxu0 %v676
        %699 = vmatprep.subr.bf16.mxu0 0
        %700 = vmatpush1.bf16.msra.mxu0 %v677
        %701 = vmatprep.subr.bf16.mxu0 0
        %702 = vmatpush1.bf16.msra.mxu0 %v678
        %703 = vmatprep.subr.bf16.mxu0 0
        %704 = vmatpush1.bf16.msra.mxu0 0
        %705 = vmatprep.subr.bf16.mxu0 0
        %706 = vmatpush1.bf16.msra.mxu0 0
        %707 = vmatprep.subr.bf16.mxu0 0
        %708 = vmatpush1.bf16.msra.mxu0 0
        %709 = vmatprep.subr.bf16.mxu0 0
        %710 = vmatpush1.bf16.msra.mxu0 0
        %711 = vmatprep.subr.bf16.mxu0 0
        %712 = vmatpush1.bf16.msra.mxu0 0
        %713 = vmatprep.subr.bf16.mxu0 0
        %714 = vmatpush1.bf16.msra.mxu0 0
        %715 = vmatprep.subr.bf16.mxu0 0
        %716 = vmatpush1.bf16.msra.mxu0 0
        %717 = vmatprep.subr.bf16.mxu0 0
        %718 = vmatpush1.bf16.msra.mxu0 0
        %719 = vmatprep.mubr.bf16.mxu0 0
        %720 = vmatmul.mubr.bf16.gmra.mrb[0].mxu0 %v612
        %v721 = vpop.f32.mrb[0].mxu0
        %v722 = vadd.f32 %v637, %v721
        %v723 = vpop.f32.mrb[0].mxu0
        %v724 = vpop.f32.mrb[0].mxu0
        %v725 = vadd.f32 %v637, %v724
        %v726 = vpop.f32.mrb[0].mxu0
        %727 = vmatprep.mubr.bf16.mxu0 0
        %728 = vmatmul.mubr.bf16.gmra.mrb[0].mxu0 %v613
        %v729 = vpop.f32.mrb[0].mxu0
        %v730 = vadd.f32 %v637, %v729
        %v731 = vpop.f32.mrb[0].mxu0
        %v732 = vpop.f32.mrb[0].mxu0
        %v733 = vadd.f32 %v637, %v732
        %v734 = vpop.f32.mrb[0].mxu0
        %735 = vmatprep.mubr.bf16.mxu0 0
        %736 = vmatmul.mubr.bf16.gmra.mrb[0].mxu0 %v614
        %v737 = vpop.f32.mrb[0].mxu0
        %v738 = vadd.f32 %v637, %v737
        %v739 = vpop.f32.mrb[0].mxu0
        %v740 = vpop.f32.mrb[0].mxu0
        %v741 = vadd.f32 %v637, %v740
        %v742 = vpop.f32.mrb[0].mxu0
        %743 = vmatprep.mubr.bf16.mxu0 0
        %744 = vmatmul.mubr.bf16.gmra.mrb[0].mxu0 %v615
        %v745 = vpop.f32.mrb[0].mxu0
        %v746 = vadd.f32 %v637, %v745
        %v747 = vpop.f32.mrb[0].mxu0
        %v748 = vpop.f32.mrb[0].mxu0
        %v749 = vadd.f32 %v637, %v748
        %v750 = vpop.f32.mrb[0].mxu0
        %751 = vdwg.mxu0
        %v752 = vmax.f32 %v722, 0.0
        %v753 = vmax.f32 %v725, 0.0
        %v754 = vmax.f32 %v730, 0.0
        %v755 = vmax.f32 %v733, 0.0
        %v756 = vmax.f32 %v738, 0.0
        %v757 = vmax.f32 %v741, 0.0
        %v758 = vmax.f32 %v746, 0.0
        %v759 = vmax.f32 %v749, 0.0
        %v760 = vpack.c.bf16 %v753, %v752
        %v761 = vpack.c.bf16 %v755, %v754
        %v762 = vpack.c.bf16 %v757, %v756
        %v763 = vpack.c.bf16 %v759, %v758
        %764 = vst.msk [vmem:[#allocation3] sm:$0xff] %vm600, %v760
        %765 = vst.msk [vmem:[#allocation3 + $0x8] sm:$0xff] %vm600, %v761
        %s766 = scalar_lea.vmem [#allocation3], 48
        %767 = vst.msk [vmem:[%s766] sm:$0xff] %vm600, %v762
        %768 = vst.msk [vmem:[%s766 + $0x8] sm:$0xff] %vm600, %v763
        %p769 = scmp.eq.s32.totalorder %s27, 0
        // Predicated region
        $region117: #{bottleneck_forward.1} parent=47 // pred_check
          %p770 = pneg %p769
        $region118: #{bottleneck_forward.1} parent=47 // pred_check_branch
          %772 = sbr.rel (%p770) target = $region120
        $region119: #{bottleneck_forward.1} parent=47 // pred_region
          %773 = vst.msk [vmem:[#allocation3] sm:$0xff] %vm600, 0
          %774 = vst.msk [vmem:[#allocation3 + $0x8] sm:$0xff] %vm600, 0
        $region120: #{bottleneck_forward.1} parent=47 // pred_fallthru
          _
        %p775 = scmp.eq.s32.totalorder %s27, 3
        // Predicated region
        $region121: #{bottleneck_forward.1} parent=47 // pred_check
          %p776 = pneg %p775
        $region122: #{bottleneck_forward.1} parent=47 // pred_check_branch
          %778 = sbr.rel (%p776) target = $region124
        $region123: #{bottleneck_forward.1} parent=47 // pred_region
          %779 = vst.msk [vmem:[%s766] sm:$0xff] %vm600, 0
          %780 = vst.msk [vmem:[%s766 + $0x8] sm:$0xff] %vm600, 0
        $region124: #{bottleneck_forward.1} parent=47 // pred_fallthru
          _
        %v781 = vlaneseq
        %v782 = vshrl.u32 %v781, 7
        %v783 = vadd.s32 %v782, 8
        %vm784 = vcmp.ge.s32.totalorder %v782, 2
        %vm785 = vcmp.ge.s32.totalorder %v783, 2
        %vm786 = vcmp.lt.s32.totalorder %v782, 14
        %vm787 = vcmp.lt.s32.totalorder %v783, 14
        %v788 = vld [vmem:[#allocation3] sm:$0xff]
        %v789 = vld [vmem:[#allocation3 + $0x8] sm:$0xff]
        %v790 = vld [vmem:[#allocation3 + $0x10] sm:$0xff]
        %v791 = vld [vmem:[#allocation3 + $0x18] sm:$0xff]
        %v792 = vld [vmem:[%s4] sm:$0xf]
        %v793 = vld [vmem:[%s4 + $0x4] sm:$0xf]
        %v794 = vld [vmem:[%s4 + $0x8] sm:$0xf]
        %v795 = vld [vmem:[%s4 + $0xc] sm:$0xf]
        %v800 = vunpack.c.l.b16 %v792
        %v801 = vunpack.c.l.b16 %v793
        %v802 = vunpack.c.l.b16 %v794
        %v803 = vunpack.c.l.b16 %v795
        %v804 = vpack.c.b16 %v801, %v800
        %v805 = vpack.c.b16 %v803, %v802
        %v809 = vsel %vm600, %v788, 0
        %v812 = vsel %vm600, %v789, 0
        %v815 = vsel %vm600, %v790, 0
        %v818 = vsel %vm600, %v791, 0
        %820 = vmatprep.subr.bf16.mxu0 0
        %821 = vmatpush1.bf16.msra.mxu0 %v804
        %822 = vmatprep.subr.bf16.mxu0 0
        %823 = vmatpush1.bf16.msra.mxu0 %v805
        %824 = vmatprep.subr.bf16.mxu0 0
        %825 = vmatpush1.bf16.msra.mxu0 0
        %826 = vmatprep.subr.bf16.mxu0 0
        %827 = vmatpush1.bf16.msra.mxu0 0
        %828 = vmatprep.subr.bf16.mxu0 0
        %829 = vmatpush1.bf16.msra.mxu0 0
        %830 = vmatprep.subr.bf16.mxu0 0
        %831 = vmatpush1.bf16.msra.mxu0 0
        %832 = vmatprep.subr.bf16.mxu0 0
        %833 = vmatpush1.bf16.msra.mxu0 0
        %834 = vmatprep.subr.bf16.mxu0 0
        %835 = vmatpush1.bf16.msra.mxu0 0
        %836 = vmatprep.subr.bf16.mxu0 0
        %837 = vmatpush1.bf16.msra.mxu0 0
        %838 = vmatprep.subr.bf16.mxu0 0
        %839 = vmatpush1.bf16.msra.mxu0 0
        %840 = vmatprep.subr.bf16.mxu0 0
        %841 = vmatpush1.bf16.msra.mxu0 0
        %842 = vmatprep.subr.bf16.mxu0 0
        %843 = vmatpush1.bf16.msra.mxu0 0
        %844 = vmatprep.subr.bf16.mxu0 0
        %845 = vmatpush1.bf16.msra.mxu0 0
        %846 = vmatprep.subr.bf16.mxu0 0
        %847 = vmatpush1.bf16.msra.mxu0 0
        %848 = vmatprep.subr.bf16.mxu0 0
        %849 = vmatpush1.bf16.msra.mxu0 0
        %850 = vmatprep.subr.bf16.mxu0 0
        %851 = vmatpush1.bf16.msra.mxu0 0
        %852 = vmatprep.mubr.bf16.mxu0 0
        %853 = vmatmul.mubr.bf16.gmra.mrb[0].mxu0 %v809
        %v854 = vpop.f32.mrb[0].mxu0
        %v855 = vadd.f32 0.0, %v854
        %v856 = vpop.f32.mrb[0].mxu0
        %v857 = vpop.f32.mrb[0].mxu0
        %v858 = vadd.f32 0.0, %v857
        %v859 = vpop.f32.mrb[0].mxu0
        %860 = vmatprep.mubr.bf16.mxu0 0
        %861 = vmatmul.mubr.bf16.gmra.mrb[0].mxu0 %v812
        %v862 = vpop.f32.mrb[0].mxu0
        %v863 = vadd.f32 0.0, %v862
        %v864 = vpop.f32.mrb[0].mxu0
        %v865 = vpop.f32.mrb[0].mxu0
        %v866 = vadd.f32 0.0, %v865
        %v867 = vpop.f32.mrb[0].mxu0
        %868 = vmatprep.mubr.bf16.mxu0 0
        %869 = vmatmul.mubr.bf16.gmra.mrb[0].mxu0 %v815
        %v870 = vpop.f32.mrb[0].mxu0
        %v871 = vadd.f32 0.0, %v870
        %v872 = vpop.f32.mrb[0].mxu0
        %v873 = vpop.f32.mrb[0].mxu0
        %v874 = vadd.f32 0.0, %v873
        %v875 = vpop.f32.mrb[0].mxu0
        %876 = vmatprep.mubr.bf16.mxu0 0
        %877 = vmatmul.mubr.bf16.gmra.mrb[0].mxu0 %v818
        %v878 = vpop.f32.mrb[0].mxu0
        %v879 = vadd.f32 0.0, %v878
        %v880 = vpop.f32.mrb[0].mxu0
        %v881 = vpop.f32.mrb[0].mxu0
        %v882 = vadd.f32 0.0, %v881
        %v883 = vpop.f32.mrb[0].mxu0
        %884 = vdwg.mxu0
        %v885 = vrot.slane %v855, 6
        %v886 = vrot.slane %v863, 6
        %v887 = vrot.slane %v871, 6
        %v888 = vrot.slane %v879, 6
        %v889 = vrot.slane %v858, 6
        %v890 = vrot.slane %v866, 6
        %v891 = vrot.slane %v874, 6
        %v892 = vrot.slane %v882, 6
        %vm893 = vcmp.lt.s32.totalorder %v782, 2
        %v894 = vsel %vm893, %v885, %v889
        %v895 = vsel %vm893, %v886, %v890
        %v896 = vsel %vm893, %v887, %v891
        %v897 = vsel %vm893, %v888, %v892
        %v898 = vsel %vm893, %v889, %v885
        %v899 = vsel %vm893, %v890, %v886
        %v900 = vsel %vm893, %v891, %v887
        %v901 = vsel %vm893, %v892, %v888
        %v902 = vsel %vm784, 1, 0
        %v903 = vsel %vm785, 1, 0
        %vm904 = vcmp.eq.s32.totalorder %v902, 1
        %vm905 = vcmp.eq.s32.totalorder %v903, 1
        %v906 = vsel %vm904, %v898, 0.0
        %v907 = vsel %vm905, %v894, 0.0
        %v908 = vsel %vm904, %v899, 0.0
        %v909 = vsel %vm905, %v895, 0.0
        %v910 = vsel %vm904, %v900, 0.0
        %v911 = vsel %vm905, %v896, 0.0
        %v912 = vsel %vm904, %v901, 0.0
        %v913 = vsel %vm905, %v897, 0.0
        %s914 = scalar_lea.vmem %s4, 16
        %v915 = vld [vmem:[%s914] sm:$0xf]
        %v916 = vld [vmem:[%s914 + $0x4] sm:$0xf]
        %v917 = vld [vmem:[%s914 + $0x8] sm:$0xf]
        %v918 = vld [vmem:[%s914 + $0xc] sm:$0xf]
        %v923 = vunpack.c.l.b16 %v915
        %v924 = vunpack.c.l.b16 %v916
        %v925 = vunpack.c.l.b16 %v917
        %v926 = vunpack.c.l.b16 %v918
        %v927 = vpack.c.b16 %v924, %v923
        %v928 = vpack.c.b16 %v926, %v925
        %931 = vmatprep.subr.bf16.mxu0 0
        %932 = vmatpush1.bf16.msra.mxu0 %v927
        %933 = vmatprep.subr.bf16.mxu0 0
        %934 = vmatpush1.bf16.msra.mxu0 %v928
        %935 = vmatprep.subr.bf16.mxu0 0
        %936 = vmatpush1.bf16.msra.mxu0 0
        %937 = vmatprep.subr.bf16.mxu0 0
        %938 = vmatpush1.bf16.msra.mxu0 0
        %939 = vmatprep.subr.bf16.mxu0 0
        %940 = vmatpush1.bf16.msra.mxu0 0
        %941 = vmatprep.subr.bf16.mxu0 0
        %942 = vmatpush1.bf16.msra.mxu0 0
        %943 = vmatprep.subr.bf16.mxu0 0
        %944 = vmatpush1.bf16.msra.mxu0 0
        %945 = vmatprep.subr.bf16.mxu0 0
        %946 = vmatpush1.bf16.msra.mxu0 0
        %947 = vmatprep.subr.bf16.mxu0 0
        %948 = vmatpush1.bf16.msra.mxu0 0
        %949 = vmatprep.subr.bf16.mxu0 0
        %950 = vmatpush1.bf16.msra.mxu0 0
        %951 = vmatprep.subr.bf16.mxu0 0
        %952 = vmatpush1.bf16.msra.mxu0 0
        %953 = vmatprep.subr.bf16.mxu0 0
        %954 = vmatpush1.bf16.msra.mxu0 0
        %955 = vmatprep.subr.bf16.mxu0 0
        %956 = vmatpush1.bf16.msra.mxu0 0
        %957 = vmatprep.subr.bf16.mxu0 0
        %958 = vmatpush1.bf16.msra.mxu0 0
        %959 = vmatprep.subr.bf16.mxu0 0
        %960 = vmatpush1.bf16.msra.mxu0 0
        %961 = vmatprep.subr.bf16.mxu0 0
        %962 = vmatpush1.bf16.msra.mxu0 0
        %963 = vmatprep.mubr.bf16.mxu0 0
        %964 = vmatmul.mubr.bf16.gmra.mrb[0].mxu0 %v809
        %v965 = vpop.f32.mrb[0].mxu0
        %v966 = vadd.f32 0.0, %v965
        %v967 = vpop.f32.mrb[0].mxu0
        %v968 = vpop.f32.mrb[0].mxu0
        %v969 = vadd.f32 0.0, %v968
        %v970 = vpop.f32.mrb[0].mxu0
        %971 = vmatprep.mubr.bf16.mxu0 0
        %972 = vmatmul.mubr.bf16.gmra.mrb[0].mxu0 %v812
        %v973 = vpop.f32.mrb[0].mxu0
        %v974 = vadd.f32 0.0, %v973
        %v975 = vpop.f32.mrb[0].mxu0
        %v976 = vpop.f32.mrb[0].mxu0
        %v977 = vadd.f32 0.0, %v976
        %v978 = vpop.f32.mrb[0].mxu0
        %979 = vmatprep.mubr.bf16.mxu0 0
        %980 = vmatmul.mubr.bf16.gmra.mrb[0].mxu0 %v815
        %v981 = vpop.f32.mrb[0].mxu0
        %v982 = vadd.f32 0.0, %v981
        %v983 = vpop.f32.mrb[0].mxu0
        %v984 = vpop.f32.mrb[0].mxu0
        %v985 = vadd.f32 0.0, %v984
        %v986 = vpop.f32.mrb[0].mxu0
        %987 = vmatprep.mubr.bf16.mxu0 0
        %988 = vmatmul.mubr.bf16.gmra.mrb[0].mxu0 %v818
        %v989 = vpop.f32.mrb[0].mxu0
        %v990 = vadd.f32 0.0, %v989
        %v991 = vpop.f32.mrb[0].mxu0
        %v992 = vpop.f32.mrb[0].mxu0
        %v993 = vadd.f32 0.0, %v992
        %v994 = vpop.f32.mrb[0].mxu0
        %995 = vdwg.mxu0
        %v996 = vadd.f32 %v906, %v966
        %v997 = vadd.f32 %v907, %v969
        %v998 = vadd.f32 %v908, %v974
        %v999 = vadd.f32 %v909, %v977
        %v1000 = vadd.f32 %v910, %v982
        %v1001 = vadd.f32 %v911, %v985
        %v1002 = vadd.f32 %v912, %v990
        %v1003 = vadd.f32 %v913, %v993
        %s1004 = scalar_lea.vmem %s4, 32
        %v1005 = vld [vmem:[%s1004] sm:$0xf]
        %v1006 = vld [vmem:[%s1004 + $0x4] sm:$0xf]
        %v1007 = vld [vmem:[%s1004 + $0x8] sm:$0xf]
        %v1008 = vld [vmem:[%s1004 + $0xc] sm:$0xf]
        %v1013 = vunpack.c.l.b16 %v1005
        %v1014 = vunpack.c.l.b16 %v1006
        %v1015 = vunpack.c.l.b16 %v1007
        %v1016 = vunpack.c.l.b16 %v1008
        %v1017 = vpack.c.b16 %v1014, %v1013
        %v1018 = vpack.c.b16 %v1016, %v1015
        %1021 = vmatprep.subr.bf16.mxu0 0
        %1022 = vmatpush1.bf16.msra.mxu0 %v1017
        %1023 = vmatprep.subr.bf16.mxu0 0
        %1024 = vmatpush1.bf16.msra.mxu0 %v1018
        %1025 = vmatprep.subr.bf16.mxu0 0
        %1026 = vmatpush1.bf16.msra.mxu0 0
        %1027 = vmatprep.subr.bf16.mxu0 0
        %1028 = vmatpush1.bf16.msra.mxu0 0
        %1029 = vmatprep.subr.bf16.mxu0 0
        %1030 = vmatpush1.bf16.msra.mxu0 0
        %1031 = vmatprep.subr.bf16.mxu0 0
        %1032 = vmatpush1.bf16.msra.mxu0 0
        %1033 = vmatprep.subr.bf16.mxu0 0
        %1034 = vmatpush1.bf16.msra.mxu0 0
        %1035 = vmatprep.subr.bf16.mxu0 0
        %1036 = vmatpush1.bf16.msra.mxu0 0
        %1037 = vmatprep.subr.bf16.mxu0 0
        %1038 = vmatpush1.bf16.msra.mxu0 0
        %1039 = vmatprep.subr.bf16.mxu0 0
        %1040 = vmatpush1.bf16.msra.mxu0 0
        %1041 = vmatprep.subr.bf16.mxu0 0
        %1042 = vmatpush1.bf16.msra.mxu0 0
        %1043 = vmatprep.subr.bf16.mxu0 0
        %1044 = vmatpush1.bf16.msra.mxu0 0
        %1045 = vmatprep.subr.bf16.mxu0 0
        %1046 = vmatpush1.bf16.msra.mxu0 0
        %1047 = vmatprep.subr.bf16.mxu0 0
        %1048 = vmatpush1.bf16.msra.mxu0 0
        %1049 = vmatprep.subr.bf16.mxu0 0
        %1050 = vmatpush1.bf16.msra.mxu0 0
        %1051 = vmatprep.subr.bf16.mxu0 0
        %1052 = vmatpush1.bf16.msra.mxu0 0
        %1053 = vmatprep.mubr.bf16.mxu0 0
        %1054 = vmatmul.mubr.bf16.gmra.mrb[0].mxu0 %v809
        %v1055 = vpop.f32.mrb[0].mxu0
        %v1056 = vadd.f32 0.0, %v1055
        %v1057 = vpop.f32.mrb[0].mxu0
        %v1058 = vpop.f32.mrb[0].mxu0
        %v1059 = vadd.f32 0.0, %v1058
        %v1060 = vpop.f32.mrb[0].mxu0
        %1061 = vmatprep.mubr.bf16.mxu0 0
        %1062 = vmatmul.mubr.bf16.gmra.mrb[0].mxu0 %v812
        %v1063 = vpop.f32.mrb[0].mxu0
        %v1064 = vadd.f32 0.0, %v1063
        %v1065 = vpop.f32.mrb[0].mxu0
        %v1066 = vpop.f32.mrb[0].mxu0
        %v1067 = vadd.f32 0.0, %v1066
        %v1068 = vpop.f32.mrb[0].mxu0
        %1069 = vmatprep.mubr.bf16.mxu0 0
        %1070 = vmatmul.mubr.bf16.gmra.mrb[0].mxu0 %v815
        %v1071 = vpop.f32.mrb[0].mxu0
        %v1072 = vadd.f32 0.0, %v1071
        %v1073 = vpop.f32.mrb[0].mxu0
        %v1074 = vpop.f32.mrb[0].mxu0
        %v1075 = vadd.f32 0.0, %v1074
        %v1076 = vpop.f32.mrb[0].mxu0
        %1077 = vmatprep.mubr.bf16.mxu0 0
        %1078 = vmatmul.mubr.bf16.gmra.mrb[0].mxu0 %v818
        %v1079 = vpop.f32.mrb[0].mxu0
        %v1080 = vadd.f32 0.0, %v1079
        %v1081 = vpop.f32.mrb[0].mxu0
        %v1082 = vpop.f32.mrb[0].mxu0
        %v1083 = vadd.f32 0.0, %v1082
        %v1084 = vpop.f32.mrb[0].mxu0
        %1085 = vdwg.mxu0
        %v1086 = vrot.slane %v1056, 2
        %v1087 = vrot.slane %v1064, 2
        %v1088 = vrot.slane %v1072, 2
        %v1089 = vrot.slane %v1080, 2
        %v1090 = vrot.slane %v1059, 2
        %v1091 = vrot.slane %v1067, 2
        %v1092 = vrot.slane %v1075, 2
        %v1093 = vrot.slane %v1083, 2
        %vm1094 = vcmp.lt.s32.totalorder %v782, 6
        %v1095 = vsel %vm1094, %v1086, %v1090
        %v1096 = vsel %vm1094, %v1087, %v1091
        %v1097 = vsel %vm1094, %v1088, %v1092
        %v1098 = vsel %vm1094, %v1089, %v1093
        %v1099 = vsel %vm1094, %v1090, %v1086
        %v1100 = vsel %vm1094, %v1091, %v1087
        %v1101 = vsel %vm1094, %v1092, %v1088
        %v1102 = vsel %vm1094, %v1093, %v1089
        %v1103 = vsel %vm786, 1, 0
        %v1104 = vsel %vm787, 1, 0
        %vm1105 = vcmp.eq.s32.totalorder %v1103, 1
        %vm1106 = vcmp.eq.s32.totalorder %v1104, 1
        %v1107 = vsel %vm1105, %v1095, 0.0
        %v1108 = vsel %vm1106, %v1099, 0.0
        %v1109 = vsel %vm1105, %v1096, 0.0
        %v1110 = vsel %vm1106, %v1100, 0.0
        %v1111 = vsel %vm1105, %v1097, 0.0
        %v1112 = vsel %vm1106, %v1101, 0.0
        %v1113 = vsel %vm1105, %v1098, 0.0
        %v1114 = vsel %vm1106, %v1102, 0.0
        %v1115 = vadd.f32 %v996, %v1107
        %v1116 = vadd.f32 %v997, %v1108
        %v1117 = vadd.f32 %v998, %v1109
        %v1118 = vadd.f32 %v999, %v1110
        %v1119 = vadd.f32 %v1000, %v1111
        %v1120 = vadd.f32 %v1001, %v1112
        %v1121 = vadd.f32 %v1002, %v1113
        %v1122 = vadd.f32 %v1003, %v1114
        %v1123 = vld [vmem:[%s599] sm:$0xff]
        %v1124 = vld [vmem:[%s599 + $0x8] sm:$0xff]
        %v1125 = vld [vmem:[%s599 + $0x10] sm:$0xff]
        %v1126 = vld [vmem:[%s599 + $0x18] sm:$0xff]
        %s1127 = scalar_lea.vmem %s4, 48
        %v1128 = vld [vmem:[%s1127] sm:$0xf]
        %v1129 = vld [vmem:[%s1127 + $0x4] sm:$0xf]
        %v1130 = vld [vmem:[%s1127 + $0x8] sm:$0xf]
        %v1131 = vld [vmem:[%s1127 + $0xc] sm:$0xf]
        %v1136 = vunpack.c.l.b16 %v1128
        %v1137 = vunpack.c.l.b16 %v1129
        %v1138 = vunpack.c.l.b16 %v1130
        %v1139 = vunpack.c.l.b16 %v1131
        %v1140 = vpack.c.b16 %v1137, %v1136
        %v1141 = vpack.c.b16 %v1139, %v1138
        %v1145 = vsel %vm600, %v1123, 0
        %v1148 = vsel %vm600, %v1124, 0
        %v1151 = vsel %vm600, %v1125, 0
        %v1154 = vsel %vm600, %v1126, 0
        %1156 = vmatprep.subr.bf16.mxu0 0
        %1157 = vmatpush1.bf16.msra.mxu0 %v1140
        %1158 = vmatprep.subr.bf16.mxu0 0
        %1159 = vmatpush1.bf16.msra.mxu0 %v1141
        %1160 = vmatprep.subr.bf16.mxu0 0
        %1161 = vmatpush1.bf16.msra.mxu0 0
        %1162 = vmatprep.subr.bf16.mxu0 0
        %1163 = vmatpush1.bf16.msra.mxu0 0
        %1164 = vmatprep.subr.bf16.mxu0 0
        %1165 = vmatpush1.bf16.msra.mxu0 0
        %1166 = vmatprep.subr.bf16.mxu0 0
        %1167 = vmatpush1.bf16.msra.mxu0 0
        %1168 = vmatprep.subr.bf16.mxu0 0
        %1169 = vmatpush1.bf16.msra.mxu0 0
        %1170 = vmatprep.subr.bf16.mxu0 0
        %1171 = vmatpush1.bf16.msra.mxu0 0
        %1172 = vmatprep.subr.bf16.mxu0 0
        %1173 = vmatpush1.bf16.msra.mxu0 0
        %1174 = vmatprep.subr.bf16.mxu0 0
        %1175 = vmatpush1.bf16.msra.mxu0 0
        %1176 = vmatprep.subr.bf16.mxu0 0
        %1177 = vmatpush1.bf16.msra.mxu0 0
        %1178 = vmatprep.subr.bf16.mxu0 0
        %1179 = vmatpush1.bf16.msra.mxu0 0
        %1180 = vmatprep.subr.bf16.mxu0 0
        %1181 = vmatpush1.bf16.msra.mxu0 0
        %1182 = vmatprep.subr.bf16.mxu0 0
        %1183 = vmatpush1.bf16.msra.mxu0 0
        %1184 = vmatprep.subr.bf16.mxu0 0
        %1185 = vmatpush1.bf16.msra.mxu0 0
        %1186 = vmatprep.subr.bf16.mxu0 0
        %1187 = vmatpush1.bf16.msra.mxu0 0
        %1188 = vmatprep.mubr.bf16.mxu0 0
        %1189 = vmatmul.mubr.bf16.gmra.mrb[0].mxu0 %v1145
        %v1190 = vpop.f32.mrb[0].mxu0
        %v1191 = vadd.f32 0.0, %v1190
        %v1192 = vpop.f32.mrb[0].mxu0
        %v1193 = vpop.f32.mrb[0].mxu0
        %v1194 = vadd.f32 0.0, %v1193
        %v1195 = vpop.f32.mrb[0].mxu0
        %1196 = vmatprep.mubr.bf16.mxu0 0
        %1197 = vmatmul.mubr.bf16.gmra.mrb[0].mxu0 %v1148
        %v1198 = vpop.f32.mrb[0].mxu0
        %v1199 = vadd.f32 0.0, %v1198
        %v1200 = vpop.f32.mrb[0].mxu0
        %v1201 = vpop.f32.mrb[0].mxu0
        %v1202 = vadd.f32 0.0, %v1201
        %v1203 = vpop.f32.mrb[0].mxu0
        %1204 = vmatprep.mubr.bf16.mxu0 0
        %1205 = vmatmul.mubr.bf16.gmra.mrb[0].mxu0 %v1151
        %v1206 = vpop.f32.mrb[0].mxu0
        %v1207 = vadd.f32 0.0, %v1206
        %v1208 = vpop.f32.mrb[0].mxu0
        %v1209 = vpop.f32.mrb[0].mxu0
        %v1210 = vadd.f32 0.0, %v1209
        %v1211 = vpop.f32.mrb[0].mxu0
        %1212 = vmatprep.mubr.bf16.mxu0 0
        %1213 = vmatmul.mubr.bf16.gmra.mrb[0].mxu0 %v1154
        %v1214 = vpop.f32.mrb[0].mxu0
        %v1215 = vadd.f32 0.0, %v1214
        %v1216 = vpop.f32.mrb[0].mxu0
        %v1217 = vpop.f32.mrb[0].mxu0
        %v1218 = vadd.f32 0.0, %v1217
        %v1219 = vpop.f32.mrb[0].mxu0
        %1220 = vdwg.mxu0
        %v1221 = vrot.slane %v1191, 6
        %v1222 = vrot.slane %v1199, 6
        %v1223 = vrot.slane %v1207, 6
        %v1224 = vrot.slane %v1215, 6
        %v1225 = vrot.slane %v1194, 6
        %v1226 = vrot.slane %v1202, 6
        %v1227 = vrot.slane %v1210, 6
        %v1228 = vrot.slane %v1218, 6
        %v1229 = vsel %vm893, %v1221, %v1225
        %v1230 = vsel %vm893, %v1222, %v1226
        %v1231 = vsel %vm893, %v1223, %v1227
        %v1232 = vsel %vm893, %v1224, %v1228
        %v1233 = vsel %vm893, %v1225, %v1221
        %v1234 = vsel %vm893, %v1226, %v1222
        %v1235 = vsel %vm893, %v1227, %v1223
        %v1236 = vsel %vm893, %v1228, %v1224
        %v1237 = vsel %vm904, %v1233, 0.0
        %v1238 = vsel %vm905, %v1229, 0.0
        %v1239 = vsel %vm904, %v1234, 0.0
        %v1240 = vsel %vm905, %v1230, 0.0
        %v1241 = vsel %vm904, %v1235, 0.0
        %v1242 = vsel %vm905, %v1231, 0.0
        %v1243 = vsel %vm904, %v1236, 0.0
        %v1244 = vsel %vm905, %v1232, 0.0
        %v1245 = vadd.f32 %v1115, %v1237
        %v1246 = vadd.f32 %v1116, %v1238
        %v1247 = vadd.f32 %v1117, %v1239
        %v1248 = vadd.f32 %v1118, %v1240
        %v1249 = vadd.f32 %v1119, %v1241
        %v1250 = vadd.f32 %v1120, %v1242
        %v1251 = vadd.f32 %v1121, %v1243
        %v1252 = vadd.f32 %v1122, %v1244
        %s1253 = scalar_lea.vmem %s4, 64
        %v1254 = vld [vmem:[%s1253] sm:$0xf]
        %v1255 = vld [vmem:[%s1253 + $0x4] sm:$0xf]
        %v1256 = vld [vmem:[%s1253 + $0x8] sm:$0xf]
        %v1257 = vld [vmem:[%s1253 + $0xc] sm:$0xf]
        %v1262 = vunpack.c.l.b16 %v1254
        %v1263 = vunpack.c.l.b16 %v1255
        %v1264 = vunpack.c.l.b16 %v1256
        %v1265 = vunpack.c.l.b16 %v1257
        %v1266 = vpack.c.b16 %v1263, %v1262
        %v1267 = vpack.c.b16 %v1265, %v1264
        %1270 = vmatprep.subr.bf16.mxu0 0
        %1271 = vmatpush1.bf16.msra.mxu0 %v1266
        %1272 = vmatprep.subr.bf16.mxu0 0
        %1273 = vmatpush1.bf16.msra.mxu0 %v1267
        %1274 = vmatprep.subr.bf16.mxu0 0
        %1275 = vmatpush1.bf16.msra.mxu0 0
        %1276 = vmatprep.subr.bf16.mxu0 0
        %1277 = vmatpush1.bf16.msra.mxu0 0
        %1278 = vmatprep.subr.bf16.mxu0 0
        %1279 = vmatpush1.bf16.msra.mxu0 0
        %1280 = vmatprep.subr.bf16.mxu0 0
        %1281 = vmatpush1.bf16.msra.mxu0 0
        %1282 = vmatprep.subr.bf16.mxu0 0
        %1283 = vmatpush1.bf16.msra.mxu0 0
        %1284 = vmatprep.subr.bf16.mxu0 0
        %1285 = vmatpush1.bf16.msra.mxu0 0
        %1286 = vmatprep.subr.bf16.mxu0 0
        %1287 = vmatpush1.bf16.msra.mxu0 0
        %1288 = vmatprep.subr.bf16.mxu0 0
        %1289 = vmatpush1.bf16.msra.mxu0 0
        %1290 = vmatprep.subr.bf16.mxu0 0
        %1291 = vmatpush1.bf16.msra.mxu0 0
        %1292 = vmatprep.subr.bf16.mxu0 0
        %1293 = vmatpush1.bf16.msra.mxu0 0
        %1294 = vmatprep.subr.bf16.mxu0 0
        %1295 = vmatpush1.bf16.msra.mxu0 0
        %1296 = vmatprep.subr.bf16.mxu0 0
        %1297 = vmatpush1.bf16.msra.mxu0 0
        %1298 = vmatprep.subr.bf16.mxu0 0
        %1299 = vmatpush1.bf16.msra.mxu0 0
        %1300 = vmatprep.subr.bf16.mxu0 0
        %1301 = vmatpush1.bf16.msra.mxu0 0
        %1302 = vmatprep.mubr.bf16.mxu0 0
        %1303 = vmatmul.mubr.bf16.gmra.mrb[0].mxu0 %v1145
        %v1304 = vpop.f32.mrb[0].mxu0
        %v1305 = vadd.f32 0.0, %v1304
        %v1306 = vpop.f32.mrb[0].mxu0
        %v1307 = vpop.f32.mrb[0].mxu0
        %v1308 = vadd.f32 0.0, %v1307
        %v1309 = vpop.f32.mrb[0].mxu0
        %1310 = vmatprep.mubr.bf16.mxu0 0
        %1311 = vmatmul.mubr.bf16.gmra.mrb[0].mxu0 %v1148
        %v1312 = vpop.f32.mrb[0].mxu0
        %v1313 = vadd.f32 0.0, %v1312
        %v1314 = vpop.f32.mrb[0].mxu0
        %v1315 = vpop.f32.mrb[0].mxu0
        %v1316 = vadd.f32 0.0, %v1315
        %v1317 = vpop.f32.mrb[0].mxu0
        %1318 = vmatprep.mubr.bf16.mxu0 0
        %1319 = vmatmul.mubr.bf16.gmra.mrb[0].mxu0 %v1151
        %v1320 = vpop.f32.mrb[0].mxu0
        %v1321 = vadd.f32 0.0, %v1320
        %v1322 = vpop.f32.mrb[0].mxu0
        %v1323 = vpop.f32.mrb[0].mxu0
        %v1324 = vadd.f32 0.0, %v1323
        %v1325 = vpop.f32.mrb[0].mxu0
        %1326 = vmatprep.mubr.bf16.mxu0 0
        %1327 = vmatmul.mubr.bf16.gmra.mrb[0].mxu0 %v1154
        %v1328 = vpop.f32.mrb[0].mxu0
        %v1329 = vadd.f32 0.0, %v1328
        %v1330 = vpop.f32.mrb[0].mxu0
        %v1331 = vpop.f32.mrb[0].mxu0
        %v1332 = vadd.f32 0.0, %v1331
        %v1333 = vpop.f32.mrb[0].mxu0
        %1334 = vdwg.mxu0
        %v1335 = vadd.f32 %v1245, %v1305
        %v1336 = vadd.f32 %v1246, %v1308
        %v1337 = vadd.f32 %v1247, %v1313
        %v1338 = vadd.f32 %v1248, %v1316
        %v1339 = vadd.f32 %v1249, %v1321
        %v1340 = vadd.f32 %v1250, %v1324
        %v1341 = vadd.f32 %v1251, %v1329
        %v1342 = vadd.f32 %v1252, %v1332
        %s1343 = scalar_lea.vmem %s4, 80
        %v1344 = vld [vmem:[%s1343] sm:$0xf]
        %v1345 = vld [vmem:[%s1343 + $0x4] sm:$0xf]
        %v1346 = vld [vmem:[%s1343 + $0x8] sm:$0xf]
        %v1347 = vld [vmem:[%s1343 + $0xc] sm:$0xf]
        %v1352 = vunpack.c.l.b16 %v1344
        %v1353 = vunpack.c.l.b16 %v1345
        %v1354 = vunpack.c.l.b16 %v1346
        %v1355 = vunpack.c.l.b16 %v1347
        %v1356 = vpack.c.b16 %v1353, %v1352
        %v1357 = vpack.c.b16 %v1355, %v1354
        %1360 = vmatprep.subr.bf16.mxu0 0
        %1361 = vmatpush1.bf16.msra.mxu0 %v1356
        %1362 = vmatprep.subr.bf16.mxu0 0
        %1363 = vmatpush1.bf16.msra.mxu0 %v1357
        %1364 = vmatprep.subr.bf16.mxu0 0
        %1365 = vmatpush1.bf16.msra.mxu0 0
        %1366 = vmatprep.subr.bf16.mxu0 0
        %1367 = vmatpush1.bf16.msra.mxu0 0
        %1368 = vmatprep.subr.bf16.mxu0 0
        %1369 = vmatpush1.bf16.msra.mxu0 0
        %1370 = vmatprep.subr.bf16.mxu0 0
        %1371 = vmatpush1.bf16.msra.mxu0 0
        %1372 = vmatprep.subr.bf16.mxu0 0
        %1373 = vmatpush1.bf16.msra.mxu0 0
        %1374 = vmatprep.subr.bf16.mxu0 0
        %1375 = vmatpush1.bf16.msra.mxu0 0
        %1376 = vmatprep.subr.bf16.mxu0 0
        %1377 = vmatpush1.bf16.msra.mxu0 0
        %1378 = vmatprep.subr.bf16.mxu0 0
        %1379 = vmatpush1.bf16.msra.mxu0 0
        %1380 = vmatprep.subr.bf16.mxu0 0
        %1381 = vmatpush1.bf16.msra.mxu0 0
        %1382 = vmatprep.subr.bf16.mxu0 0
        %1383 = vmatpush1.bf16.msra.mxu0 0
        %1384 = vmatprep.subr.bf16.mxu0 0
        %1385 = vmatpush1.bf16.msra.mxu0 0
        %1386 = vmatprep.subr.bf16.mxu0 0
        %1387 = vmatpush1.bf16.msra.mxu0 0
        %1388 = vmatprep.subr.bf16.mxu0 0
        %1389 = vmatpush1.bf16.msra.mxu0 0
        %1390 = vmatprep.subr.bf16.mxu0 0
        %1391 = vmatpush1.bf16.msra.mxu0 0
        %1392 = vmatprep.mubr.bf16.mxu0 0
        %1393 = vmatmul.mubr.bf16.gmra.mrb[0].mxu0 %v1145
        %v1394 = vpop.f32.mrb[0].mxu0
        %v1395 = vadd.f32 0.0, %v1394
        %v1396 = vpop.f32.mrb[0].mxu0
        %v1397 = vpop.f32.mrb[0].mxu0
        %v1398 = vadd.f32 0.0, %v1397
        %v1399 = vpop.f32.mrb[0].mxu0
        %1400 = vmatprep.mubr.bf16.mxu0 0
        %1401 = vmatmul.mubr.bf16.gmra.mrb[0].mxu0 %v1148
        %v1402 = vpop.f32.mrb[0].mxu0
        %v1403 = vadd.f32 0.0, %v1402
        %v1404 = vpop.f32.mrb[0].mxu0
        %v1405 = vpop.f32.mrb[0].mxu0
        %v1406 = vadd.f32 0.0, %v1405
        %v1407 = vpop.f32.mrb[0].mxu0
        %1408 = vmatprep.mubr.bf16.mxu0 0
        %1409 = vmatmul.mubr.bf16.gmra.mrb[0].mxu0 %v1151
        %v1410 = vpop.f32.mrb[0].mxu0
        %v1411 = vadd.f32 0.0, %v1410
        %v1412 = vpop.f32.mrb[0].mxu0
        %v1413 = vpop.f32.mrb[0].mxu0
        %v1414 = vadd.f32 0.0, %v1413
        %v1415 = vpop.f32.mrb[0].mxu0
        %1416 = vmatprep.mubr.bf16.mxu0 0
        %1417 = vmatmul.mubr.bf16.gmra.mrb[0].mxu0 %v1154
        %v1418 = vpop.f32.mrb[0].mxu0
        %v1419 = vadd.f32 0.0, %v1418
        %v1420 = vpop.f32.mrb[0].mxu0
        %v1421 = vpop.f32.mrb[0].mxu0
        %v1422 = vadd.f32 0.0, %v1421
        %v1423 = vpop.f32.mrb[0].mxu0
        %1424 = vdwg.mxu0
        %v1425 = vrot.slane %v1395, 2
        %v1426 = vrot.slane %v1403, 2
        %v1427 = vrot.slane %v1411, 2
        %v1428 = vrot.slane %v1419, 2
        %v1429 = vrot.slane %v1398, 2
        %v1430 = vrot.slane %v1406, 2
        %v1431 = vrot.slane %v1414, 2
        %v1432 = vrot.slane %v1422, 2
        %v1433 = vsel %vm1094, %v1425, %v1429
        %v1434 = vsel %vm1094, %v1426, %v1430
        %v1435 = vsel %vm1094, %v1427, %v1431
        %v1436 = vsel %vm1094, %v1428, %v1432
        %v1437 = vsel %vm1094, %v1429, %v1425
        %v1438 = vsel %vm1094, %v1430, %v1426
        %v1439 = vsel %vm1094, %v1431, %v1427
        %v1440 = vsel %vm1094, %v1432, %v1428
        %v1441 = vsel %vm1105, %v1433, 0.0
        %v1442 = vsel %vm1106, %v1437, 0.0
        %v1443 = vsel %vm1105, %v1434, 0.0
        %v1444 = vsel %vm1106, %v1438, 0.0
        %v1445 = vsel %vm1105, %v1435, 0.0
        %v1446 = vsel %vm1106, %v1439, 0.0
        %v1447 = vsel %vm1105, %v1436, 0.0
        %v1448 = vsel %vm1106, %v1440, 0.0
        %v1449 = vadd.f32 %v1335, %v1441
        %v1450 = vadd.f32 %v1336, %v1442
        %v1451 = vadd.f32 %v1337, %v1443
        %v1452 = vadd.f32 %v1338, %v1444
        %v1453 = vadd.f32 %v1339, %v1445
        %v1454 = vadd.f32 %v1340, %v1446
        %v1455 = vadd.f32 %v1341, %v1447
        %v1456 = vadd.f32 %v1342, %v1448
        %s1457 = scalar_lea.vmem [#allocation3], 32
        %v1458 = vld [vmem:[%s1457] sm:$0xff]
        %v1459 = vld [vmem:[%s1457 + $0x8] sm:$0xff]
        %v1460 = vld [vmem:[%s1457 + $0x10] sm:$0xff]
        %v1461 = vld [vmem:[%s1457 + $0x18] sm:$0xff]
        %s1462 = scalar_lea.vmem %s4, 96
        %v1463 = vld [vmem:[%s1462] sm:$0xf]
        %v1464 = vld [vmem:[%s1462 + $0x4] sm:$0xf]
        %v1465 = vld [vmem:[%s1462 + $0x8] sm:$0xf]
        %v1466 = vld [vmem:[%s1462 + $0xc] sm:$0xf]
        %v1471 = vunpack.c.l.b16 %v1463
        %v1472 = vunpack.c.l.b16 %v1464
        %v1473 = vunpack.c.l.b16 %v1465
        %v1474 = vunpack.c.l.b16 %v1466
        %v1475 = vpack.c.b16 %v1472, %v1471
        %v1476 = vpack.c.b16 %v1474, %v1473
        %v1480 = vsel %vm600, %v1458, 0
        %v1483 = vsel %vm600, %v1459, 0
        %v1486 = vsel %vm600, %v1460, 0
        %v1489 = vsel %vm600, %v1461, 0
        %1491 = vmatprep.subr.bf16.mxu0 0
        %1492 = vmatpush1.bf16.msra.mxu0 %v1475
        %1493 = vmatprep.subr.bf16.mxu0 0
        %1494 = vmatpush1.bf16.msra.mxu0 %v1476
        %1495 = vmatprep.subr.bf16.mxu0 0
        %1496 = vmatpush1.bf16.msra.mxu0 0
        %1497 = vmatprep.subr.bf16.mxu0 0
        %1498 = vmatpush1.bf16.msra.mxu0 0
        %1499 = vmatprep.subr.bf16.mxu0 0
        %1500 = vmatpush1.bf16.msra.mxu0 0
        %1501 = vmatprep.subr.bf16.mxu0 0
        %1502 = vmatpush1.bf16.msra.mxu0 0
        %1503 = vmatprep.subr.bf16.mxu0 0
        %1504 = vmatpush1.bf16.msra.mxu0 0
        %1505 = vmatprep.subr.bf16.mxu0 0
        %1506 = vmatpush1.bf16.msra.mxu0 0
        %1507 = vmatprep.subr.bf16.mxu0 0
        %1508 = vmatpush1.bf16.msra.mxu0 0
        %1509 = vmatprep.subr.bf16.mxu0 0
        %1510 = vmatpush1.bf16.msra.mxu0 0
        %1511 = vmatprep.subr.bf16.mxu0 0
        %1512 = vmatpush1.bf16.msra.mxu0 0
        %1513 = vmatprep.subr.bf16.mxu0 0
        %1514 = vmatpush1.bf16.msra.mxu0 0
        %1515 = vmatprep.subr.bf16.mxu0 0
        %1516 = vmatpush1.bf16.msra.mxu0 0
        %1517 = vmatprep.subr.bf16.mxu0 0
        %1518 = vmatpush1.bf16.msra.mxu0 0
        %1519 = vmatprep.subr.bf16.mxu0 0
        %1520 = vmatpush1.bf16.msra.mxu0 0
        %1521 = vmatprep.subr.bf16.mxu0 0
        %1522 = vmatpush1.bf16.msra.mxu0 0
        %1523 = vmatprep.mubr.bf16.mxu0 0
        %1524 = vmatmul.mubr.bf16.gmra.mrb[0].mxu0 %v1480
        %v1525 = vpop.f32.mrb[0].mxu0
        %v1526 = vadd.f32 0.0, %v1525
        %v1527 = vpop.f32.mrb[0].mxu0
        %v1528 = vpop.f32.mrb[0].mxu0
        %v1529 = vadd.f32 0.0, %v1528
        %v1530 = vpop.f32.mrb[0].mxu0
        %1531 = vmatprep.mubr.bf16.mxu0 0
        %1532 = vmatmul.mubr.bf16.gmra.mrb[0].mxu0 %v1483
        %v1533 = vpop.f32.mrb[0].mxu0
        %v1534 = vadd.f32 0.0, %v1533
        %v1535 = vpop.f32.mrb[0].mxu0
        %v1536 = vpop.f32.mrb[0].mxu0
        %v1537 = vadd.f32 0.0, %v1536
        %v1538 = vpop.f32.mrb[0].mxu0
        %1539 = vmatprep.mubr.bf16.mxu0 0
        %1540 = vmatmul.mubr.bf16.gmra.mrb[0].mxu0 %v1486
        %v1541 = vpop.f32.mrb[0].mxu0
        %v1542 = vadd.f32 0.0, %v1541
        %v1543 = vpop.f32.mrb[0].mxu0
        %v1544 = vpop.f32.mrb[0].mxu0
        %v1545 = vadd.f32 0.0, %v1544
        %v1546 = vpop.f32.mrb[0].mxu0
        %1547 = vmatprep.mubr.bf16.mxu0 0
        %1548 = vmatmul.mubr.bf16.gmra.mrb[0].mxu0 %v1489
        %v1549 = vpop.f32.mrb[0].mxu0
        %v1550 = vadd.f32 0.0, %v1549
        %v1551 = vpop.f32.mrb[0].mxu0
        %v1552 = vpop.f32.mrb[0].mxu0
        %v1553 = vadd.f32 0.0, %v1552
        %v1554 = vpop.f32.mrb[0].mxu0
        %1555 = vdwg.mxu0
        %v1556 = vrot.slane %v1526, 6
        %v1557 = vrot.slane %v1534, 6
        %v1558 = vrot.slane %v1542, 6
        %v1559 = vrot.slane %v1550, 6
        %v1560 = vrot.slane %v1529, 6
        %v1561 = vrot.slane %v1537, 6
        %v1562 = vrot.slane %v1545, 6
        %v1563 = vrot.slane %v1553, 6
        %v1564 = vsel %vm893, %v1556, %v1560
        %v1565 = vsel %vm893, %v1557, %v1561
        %v1566 = vsel %vm893, %v1558, %v1562
        %v1567 = vsel %vm893, %v1559, %v1563
        %v1568 = vsel %vm893, %v1560, %v1556
        %v1569 = vsel %vm893, %v1561, %v1557
        %v1570 = vsel %vm893, %v1562, %v1558
        %v1571 = vsel %vm893, %v1563, %v1559
        %v1572 = vsel %vm904, %v1568, 0.0
        %v1573 = vsel %vm905, %v1564, 0.0
        %v1574 = vsel %vm904, %v1569, 0.0
        %v1575 = vsel %vm905, %v1565, 0.0
        %v1576 = vsel %vm904, %v1570, 0.0
        %v1577 = vsel %vm905, %v1566, 0.0
        %v1578 = vsel %vm904, %v1571, 0.0
        %v1579 = vsel %vm905, %v1567, 0.0
        %v1580 = vadd.f32 %v1449, %v1572
        %v1581 = vadd.f32 %v1450, %v1573
        %v1582 = vadd.f32 %v1451, %v1574
        %v1583 = vadd.f32 %v1452, %v1575
        %v1584 = vadd.f32 %v1453, %v1576
        %v1585 = vadd.f32 %v1454, %v1577
        %v1586 = vadd.f32 %v1455, %v1578
        %v1587 = vadd.f32 %v1456, %v1579
        %s1588 = scalar_lea.vmem %s4, 112
        %v1589 = vld [vmem:[%s1588] sm:$0xf]
        %v1590 = vld [vmem:[%s1588 + $0x4] sm:$0xf]
        %v1591 = vld [vmem:[%s1588 + $0x8] sm:$0xf]
        %v1592 = vld [vmem:[%s1588 + $0xc] sm:$0xf]
        %v1597 = vunpack.c.l.b16 %v1589
        %v1598 = vunpack.c.l.b16 %v1590
        %v1599 = vunpack.c.l.b16 %v1591
        %v1600 = vunpack.c.l.b16 %v1592
        %v1601 = vpack.c.b16 %v1598, %v1597
        %v1602 = vpack.c.b16 %v1600, %v1599
        %1605 = vmatprep.subr.bf16.mxu0 0
        %1606 = vmatpush1.bf16.msra.mxu0 %v1601
        %1607 = vmatprep.subr.bf16.mxu0 0
        %1608 = vmatpush1.bf16.msra.mxu0 %v1602
        %1609 = vmatprep.subr.bf16.mxu0 0
        %1610 = vmatpush1.bf16.msra.mxu0 0
        %1611 = vmatprep.subr.bf16.mxu0 0
        %1612 = vmatpush1.bf16.msra.mxu0 0
        %1613 = vmatprep.subr.bf16.mxu0 0
        %1614 = vmatpush1.bf16.msra.mxu0 0
        %1615 = vmatprep.subr.bf16.mxu0 0
        %1616 = vmatpush1.bf16.msra.mxu0 0
        %1617 = vmatprep.subr.bf16.mxu0 0
        %1618 = vmatpush1.bf16.msra.mxu0 0
        %1619 = vmatprep.subr.bf16.mxu0 0
        %1620 = vmatpush1.bf16.msra.mxu0 0
        %1621 = vmatprep.subr.bf16.mxu0 0
        %1622 = vmatpush1.bf16.msra.mxu0 0
        %1623 = vmatprep.subr.bf16.mxu0 0
        %1624 = vmatpush1.bf16.msra.mxu0 0
        %1625 = vmatprep.subr.bf16.mxu0 0
        %1626 = vmatpush1.bf16.msra.mxu0 0
        %1627 = vmatprep.subr.bf16.mxu0 0
        %1628 = vmatpush1.bf16.msra.mxu0 0
        %1629 = vmatprep.subr.bf16.mxu0 0
        %1630 = vmatpush1.bf16.msra.mxu0 0
        %1631 = vmatprep.subr.bf16.mxu0 0
        %1632 = vmatpush1.bf16.msra.mxu0 0
        %1633 = vmatprep.subr.bf16.mxu0 0
        %1634 = vmatpush1.bf16.msra.mxu0 0
        %1635 = vmatprep.subr.bf16.mxu0 0
        %1636 = vmatpush1.bf16.msra.mxu0 0
        %1637 = vmatprep.mubr.bf16.mxu0 0
        %1638 = vmatmul.mubr.bf16.gmra.mrb[0].mxu0 %v1480
        %v1639 = vpop.f32.mrb[0].mxu0
        %v1640 = vadd.f32 0.0, %v1639
        %v1641 = vpop.f32.mrb[0].mxu0
        %v1642 = vpop.f32.mrb[0].mxu0
        %v1643 = vadd.f32 0.0, %v1642
        %v1644 = vpop.f32.mrb[0].mxu0
        %1645 = vmatprep.mubr.bf16.mxu0 0
        %1646 = vmatmul.mubr.bf16.gmra.mrb[0].mxu0 %v1483
        %v1647 = vpop.f32.mrb[0].mxu0
        %v1648 = vadd.f32 0.0, %v1647
        %v1649 = vpop.f32.mrb[0].mxu0
        %v1650 = vpop.f32.mrb[0].mxu0
        %v1651 = vadd.f32 0.0, %v1650
        %v1652 = vpop.f32.mrb[0].mxu0
        %1653 = vmatprep.mubr.bf16.mxu0 0
        %1654 = vmatmul.mubr.bf16.gmra.mrb[0].mxu0 %v1486
        %v1655 = vpop.f32.mrb[0].mxu0
        %v1656 = vadd.f32 0.0, %v1655
        %v1657 = vpop.f32.mrb[0].mxu0
        %v1658 = vpop.f32.mrb[0].mxu0
        %v1659 = vadd.f32 0.0, %v1658
        %v1660 = vpop.f32.mrb[0].mxu0
        %1661 = vmatprep.mubr.bf16.mxu0 0
        %1662 = vmatmul.mubr.bf16.gmra.mrb[0].mxu0 %v1489
        %v1663 = vpop.f32.mrb[0].mxu0
        %v1664 = vadd.f32 0.0, %v1663
        %v1665 = vpop.f32.mrb[0].mxu0
        %v1666 = vpop.f32.mrb[0].mxu0
        %v1667 = vadd.f32 0.0, %v1666
        %v1668 = vpop.f32.mrb[0].mxu0
        %1669 = vdwg.mxu0
        %v1670 = vadd.f32 %v1580, %v1640
        %v1671 = vadd.f32 %v1581, %v1643
        %v1672 = vadd.f32 %v1582, %v1648
        %v1673 = vadd.f32 %v1583, %v1651
        %v1674 = vadd.f32 %v1584, %v1656
        %v1675 = vadd.f32 %v1585, %v1659
        %v1676 = vadd.f32 %v1586, %v1664
        %v1677 = vadd.f32 %v1587, %v1667
        %s1678 = scalar_lea.vmem %s4, 128
        %v1679 = vld [vmem:[%s1678] sm:$0xf]
        %v1680 = vld [vmem:[%s1678 + $0x4] sm:$0xf]
        %v1681 = vld [vmem:[%s1678 + $0x8] sm:$0xf]
        %v1682 = vld [vmem:[%s1678 + $0xc] sm:$0xf]
        %v1687 = vunpack.c.l.b16 %v1679
        %v1688 = vunpack.c.l.b16 %v1680
        %v1689 = vunpack.c.l.b16 %v1681
        %v1690 = vunpack.c.l.b16 %v1682
        %v1691 = vpack.c.b16 %v1688, %v1687
        %v1692 = vpack.c.b16 %v1690, %v1689
        %1695 = vmatprep.subr.bf16.mxu0 0
        %1696 = vmatpush1.bf16.msra.mxu0 %v1691
        %1697 = vmatprep.subr.bf16.mxu0 0
        %1698 = vmatpush1.bf16.msra.mxu0 %v1692
        %1699 = vmatprep.subr.bf16.mxu0 0
        %1700 = vmatpush1.bf16.msra.mxu0 0
        %1701 = vmatprep.subr.bf16.mxu0 0
        %1702 = vmatpush1.bf16.msra.mxu0 0
        %1703 = vmatprep.subr.bf16.mxu0 0
        %1704 = vmatpush1.bf16.msra.mxu0 0
        %1705 = vmatprep.subr.bf16.mxu0 0
        %1706 = vmatpush1.bf16.msra.mxu0 0
        %1707 = vmatprep.subr.bf16.mxu0 0
        %1708 = vmatpush1.bf16.msra.mxu0 0
        %1709 = vmatprep.subr.bf16.mxu0 0
        %1710 = vmatpush1.bf16.msra.mxu0 0
        %1711 = vmatprep.subr.bf16.mxu0 0
        %1712 = vmatpush1.bf16.msra.mxu0 0
        %1713 = vmatprep.subr.bf16.mxu0 0
        %1714 = vmatpush1.bf16.msra.mxu0 0
        %1715 = vmatprep.subr.bf16.mxu0 0
        %1716 = vmatpush1.bf16.msra.mxu0 0
        %1717 = vmatprep.subr.bf16.mxu0 0
        %1718 = vmatpush1.bf16.msra.mxu0 0
        %1719 = vmatprep.subr.bf16.mxu0 0
        %1720 = vmatpush1.bf16.msra.mxu0 0
        %1721 = vmatprep.subr.bf16.mxu0 0
        %1722 = vmatpush1.bf16.msra.mxu0 0
        %1723 = vmatprep.subr.bf16.mxu0 0
        %1724 = vmatpush1.bf16.msra.mxu0 0
        %1725 = vmatprep.subr.bf16.mxu0 0
        %1726 = vmatpush1.bf16.msra.mxu0 0
        %1727 = vmatprep.mubr.bf16.mxu0 0
        %1728 = vmatmul.mubr.bf16.gmra.mrb[0].mxu0 %v1480
        %v1729 = vpop.f32.mrb[0].mxu0
        %v1730 = vadd.f32 0.0, %v1729
        %v1731 = vpop.f32.mrb[0].mxu0
        %v1732 = vpop.f32.mrb[0].mxu0
        %v1733 = vadd.f32 0.0, %v1732
        %v1734 = vpop.f32.mrb[0].mxu0
        %1735 = vmatprep.mubr.bf16.mxu0 0
        %1736 = vmatmul.mubr.bf16.gmra.mrb[0].mxu0 %v1483
        %v1737 = vpop.f32.mrb[0].mxu0
        %v1738 = vadd.f32 0.0, %v1737
        %v1739 = vpop.f32.mrb[0].mxu0
        %v1740 = vpop.f32.mrb[0].mxu0
        %v1741 = vadd.f32 0.0, %v1740
        %v1742 = vpop.f32.mrb[0].mxu0
        %1743 = vmatprep.mubr.bf16.mxu0 0
        %1744 = vmatmul.mubr.bf16.gmra.mrb[0].mxu0 %v1486
        %v1745 = vpop.f32.mrb[0].mxu0
        %v1746 = vadd.f32 0.0, %v1745
        %v1747 = vpop.f32.mrb[0].mxu0
        %v1748 = vpop.f32.mrb[0].mxu0
        %v1749 = vadd.f32 0.0, %v1748
        %v1750 = vpop.f32.mrb[0].mxu0
        %1751 = vmatprep.mubr.bf16.mxu0 0
        %1752 = vmatmul.mubr.bf16.gmra.mrb[0].mxu0 %v1489
        %v1753 = vpop.f32.mrb[0].mxu0
        %v1754 = vadd.f32 0.0, %v1753
        %v1755 = vpop.f32.mrb[0].mxu0
        %v1756 = vpop.f32.mrb[0].mxu0
        %v1757 = vadd.f32 0.0, %v1756
        %v1758 = vpop.f32.mrb[0].mxu0
        %1759 = vdwg.mxu0
        %v1760 = vrot.slane %v1730, 2
        %v1761 = vrot.slane %v1738, 2
        %v1762 = vrot.slane %v1746, 2
        %v1763 = vrot.slane %v1754, 2
        %v1764 = vrot.slane %v1733, 2
        %v1765 = vrot.slane %v1741, 2
        %v1766 = vrot.slane %v1749, 2
        %v1767 = vrot.slane %v1757, 2
        %v1768 = vsel %vm1094, %v1760, %v1764
        %v1769 = vsel %vm1094, %v1761, %v1765
        %v1770 = vsel %vm1094, %v1762, %v1766
        %v1771 = vsel %vm1094, %v1763, %v1767
        %v1772 = vsel %vm1094, %v1764, %v1760
        %v1773 = vsel %vm1094, %v1765, %v1761
        %v1774 = vsel %vm1094, %v1766, %v1762
        %v1775 = vsel %vm1094, %v1767, %v1763
        %v1776 = vsel %vm1105, %v1768, 0.0
        %v1777 = vsel %vm1106, %v1772, 0.0
        %v1778 = vsel %vm1105, %v1769, 0.0
        %v1779 = vsel %vm1106, %v1773, 0.0
        %v1780 = vsel %vm1105, %v1770, 0.0
        %v1781 = vsel %vm1106, %v1774, 0.0
        %v1782 = vsel %vm1105, %v1771, 0.0
        %v1783 = vsel %vm1106, %v1775, 0.0
        %v1784 = vadd.f32 %v1670, %v1776
        %v1785 = vadd.f32 %v1671, %v1777
        %v1786 = vadd.f32 %v1672, %v1778
        %v1787 = vadd.f32 %v1673, %v1779
        %v1788 = vadd.f32 %v1674, %v1780
        %v1789 = vadd.f32 %v1675, %v1781
        %v1790 = vadd.f32 %v1676, %v1782
        %v1791 = vadd.f32 %v1677, %v1783
        %v1792 = vld [vmem:[%s5] sm:$0x1]
        %v1794 = vlaneseq
        %v1795 = vshrl.u32 %v1794, 7
        %v1796 = vsub.s32 0, %v1795
        %v1797 = vrot.slane %v1792, %v1796
        %v1799 = vadd.f32 %v1784, %v1797
        %v1800 = vadd.f32 %v1785, %v1797
        %v1801 = vadd.f32 %v1786, %v1797
        %v1802 = vadd.f32 %v1787, %v1797
        %v1803 = vadd.f32 %v1788, %v1797
        %v1804 = vadd.f32 %v1789, %v1797
        %v1805 = vadd.f32 %v1790, %v1797
        %v1806 = vadd.f32 %v1791, %v1797
        %v1807 = vmax.f32 %v1799, 0.0
        %v1808 = vmax.f32 %v1800, 0.0
        %v1809 = vmax.f32 %v1801, 0.0
        %v1810 = vmax.f32 %v1802, 0.0
        %v1811 = vmax.f32 %v1803, 0.0
        %v1812 = vmax.f32 %v1804, 0.0
        %v1813 = vmax.f32 %v1805, 0.0
        %v1814 = vmax.f32 %v1806, 0.0
        %v1815 = vpack.c.bf16 %v1808, %v1807
        %v1816 = vpack.c.bf16 %v1810, %v1809
        %v1817 = vpack.c.bf16 %v1812, %v1811
        %v1818 = vpack.c.bf16 %v1814, %v1813
        %v1819 = vld [vmem:[%s6] sm:$0xf]
        %v1820 = vld [vmem:[%s6 + $0x4] sm:$0xf]
        %v1821 = vld [vmem:[%s6 + $0x8] sm:$0xf]
        %v1822 = vld [vmem:[%s6 + $0xc] sm:$0xf]
        %v1823 = vld [vmem:[%s7] sm:$0x1]
        %v1825 = vlaneseq
        %v1826 = vshrl.u32 %v1825, 7
        %v1827 = vsub.s32 0, %v1826
        %v1828 = vrot.slane %v1823, %v1827
        %v1834 = vunpack.c.l.b16 %v1819
        %v1835 = vunpack.c.l.b16 %v1820
        %v1836 = vunpack.c.l.b16 %v1821
        %v1837 = vunpack.c.l.b16 %v1822
        %v1838 = vpack.c.b16 %v1835, %v1834
        %v1839 = vpack.c.b16 %v1837, %v1836
        %v1843 = vsel %vm600, %v1815, 0
        %v1846 = vsel %vm600, %v1816, 0
        %v1849 = vsel %vm600, %v1817, 0
        %v1852 = vsel %vm600, %v1818, 0
        %1854 = vmatprep.subr.bf16.mxu0 0
        %1855 = vmatpush1.bf16.msra.mxu0 %v1838
        %1856 = vmatprep.subr.bf16.mxu0 0
        %1857 = vmatpush1.bf16.msra.mxu0 %v1839
        %1858 = vmatprep.subr.bf16.mxu0 0
        %1859 = vmatpush1.bf16.msra.mxu0 0
        %1860 = vmatprep.subr.bf16.mxu0 0
        %1861 = vmatpush1.bf16.msra.mxu0 0
        %1862 = vmatprep.subr.bf16.mxu0 0
        %1863 = vmatpush1.bf16.msra.mxu0 0
        %1864 = vmatprep.subr.bf16.mxu0 0
        %1865 = vmatpush1.bf16.msra.mxu0 0
        %1866 = vmatprep.subr.bf16.mxu0 0
        %1867 = vmatpush1.bf16.msra.mxu0 0
        %1868 = vmatprep.subr.bf16.mxu0 0
        %1869 = vmatpush1.bf16.msra.mxu0 0
        %1870 = vmatprep.subr.bf16.mxu0 0
        %1871 = vmatpush1.bf16.msra.mxu0 0
        %1872 = vmatprep.subr.bf16.mxu0 0
        %1873 = vmatpush1.bf16.msra.mxu0 0
        %1874 = vmatprep.subr.bf16.mxu0 0
        %1875 = vmatpush1.bf16.msra.mxu0 0
        %1876 = vmatprep.subr.bf16.mxu0 0
        %1877 = vmatpush1.bf16.msra.mxu0 0
        %1878 = vmatprep.subr.bf16.mxu0 0
        %1879 = vmatpush1.bf16.msra.mxu0 0
        %1880 = vmatprep.subr.bf16.mxu0 0
        %1881 = vmatpush1.bf16.msra.mxu0 0
        %1882 = vmatprep.subr.bf16.mxu0 0
        %1883 = vmatpush1.bf16.msra.mxu0 0
        %1884 = vmatprep.subr.bf16.mxu0 0
        %1885 = vmatpush1.bf16.msra.mxu0 0
        %1886 = vmatprep.mubr.bf16.mxu0 0
        %1887 = vmatmul.mubr.bf16.gmra.mrb[0].mxu0 %v1843
        %v1888 = vpop.f32.mrb[0].mxu0
        %v1889 = vadd.f32 %v1828, %v1888
        %v1890 = vpop.f32.mrb[0].mxu0
        %v1891 = vpop.f32.mrb[0].mxu0
        %v1892 = vadd.f32 %v1828, %v1891
        %v1893 = vpop.f32.mrb[0].mxu0
        %1894 = vmatprep.mubr.bf16.mxu0 0
        %1895 = vmatmul.mubr.bf16.gmra.mrb[0].mxu0 %v1846
        %v1896 = vpop.f32.mrb[0].mxu0
        %v1897 = vadd.f32 %v1828, %v1896
        %v1898 = vpop.f32.mrb[0].mxu0
        %v1899 = vpop.f32.mrb[0].mxu0
        %v1900 = vadd.f32 %v1828, %v1899
        %v1901 = vpop.f32.mrb[0].mxu0
        %1902 = vmatprep.mubr.bf16.mxu0 0
        %1903 = vmatmul.mubr.bf16.gmra.mrb[0].mxu0 %v1849
        %v1904 = vpop.f32.mrb[0].mxu0
        %v1905 = vadd.f32 %v1828, %v1904
        %v1906 = vpop.f32.mrb[0].mxu0
        %v1907 = vpop.f32.mrb[0].mxu0
        %v1908 = vadd.f32 %v1828, %v1907
        %v1909 = vpop.f32.mrb[0].mxu0
        %1910 = vmatprep.mubr.bf16.mxu0 0
        %1911 = vmatmul.mubr.bf16.gmra.mrb[0].mxu0 %v1852
        %v1912 = vpop.f32.mrb[0].mxu0
        %v1913 = vadd.f32 %v1828, %v1912
        %v1914 = vpop.f32.mrb[0].mxu0
        %v1915 = vpop.f32.mrb[0].mxu0
        %v1916 = vadd.f32 %v1828, %v1915
        %v1917 = vpop.f32.mrb[0].mxu0
        %1918 = vdwg.mxu0
        %v1919 = vunpack.c.l.bf16 %v419
        %v1920 = vunpack.c.l.bf16 %v420
        %v1921 = vunpack.c.l.bf16 %v421
        %v1922 = vunpack.c.l.bf16 %v422
        %v1923 = vunpack.c.l.bf16 %v423
        %v1924 = vunpack.c.l.bf16 %v424
        %v1925 = vunpack.c.l.bf16 %v425
        %v1926 = vunpack.c.l.bf16 %v426
        %v1927 = vadd.f32 %v1889, %v1919
        %v1928 = vadd.f32 %v1892, %v1920
        %v1929 = vadd.f32 %v1897, %v1921
        %v1930 = vadd.f32 %v1900, %v1922
        %v1931 = vadd.f32 %v1905, %v1923
        %v1932 = vadd.f32 %v1908, %v1924
        %v1933 = vadd.f32 %v1913, %v1925
        %v1934 = vadd.f32 %v1916, %v1926
        %v1935 = vmax.f32 %v1927, 0.0
        %v1936 = vmax.f32 %v1928, 0.0
        %v1937 = vmax.f32 %v1929, 0.0
        %v1938 = vmax.f32 %v1930, 0.0
        %v1939 = vmax.f32 %v1931, 0.0
        %v1940 = vmax.f32 %v1932, 0.0
        %v1941 = vmax.f32 %v1933, 0.0
        %v1942 = vmax.f32 %v1934, 0.0
        %v1943 = vpack.c.bf16 %v1936, %v1935
        %v1944 = vpack.c.bf16 %v1938, %v1937
        %v1945 = vpack.c.bf16 %v1940, %v1939
        %v1946 = vpack.c.bf16 %v1942, %v1941
        %v1951 = vunpack.c.l.b16 %v1943
        %v1952 = vunpack.c.h.b16 %v1943
        %v1953 = vunpack.c.l.b16 %v1944
        %v1954 = vunpack.c.h.b16 %v1944
        %v1955 = vunpack.c.l.b16 %v1945
        %v1956 = vunpack.c.h.b16 %v1945
        %v1957 = vunpack.c.l.b16 %v1946
        %v1958 = vunpack.c.h.b16 %v1946
        %v1959 = vpack.c.b16 %v1951, %v1951
        %v1960 = vpack.c.b16 %v1952, %v1952
        %v1961 = vpack.c.b16 %v1953, %v1953
        %v1962 = vpack.c.b16 %v1954, %v1954
        %v1963 = vpack.c.b16 %v1955, %v1955
        %v1964 = vpack.c.b16 %v1956, %v1956
        %v1965 = vpack.c.b16 %v1957, %v1957
        %v1966 = vpack.c.b16 %v1958, %v1958
        %1975 = vst [vmem:[%s299] sm:$0xf] %v1959
        %1976 = vst [vmem:[%s299 + $0x4] sm:$0xf] %v1960
        %1977 = vst [vmem:[%s299 + $0x8] sm:$0xf] %v1961
        %1978 = vst [vmem:[%s299 + $0xc] sm:$0xf] %v1962
        %1979 = vst [vmem:[%s299 + $0x10] sm:$0xf] %v1963
        %1980 = vst [vmem:[%s299 + $0x14] sm:$0xf] %v1964
        %1981 = vst [vmem:[%s299 + $0x18] sm:$0xf] %v1965
        %1982 = vst [vmem:[%s299 + $0x1c] sm:$0xf] %v1966
        %s1983 = sand.u32 %s198, 1
        %s1984 = scalar_lea.sflag [#allocation6], %s1983
        %s1985 = sand.u32 %s198, 1
        %s1986 = smul.addr %s1985, 32
        %s1987 = scalar_lea.vmem [#allocation5], %s1986
        // Predicated region
        $region125: #{bottleneck_forward.1} parent=47 // pred_check
          %p1988 = pneg %p208
        $region126: #{bottleneck_forward.1} parent=47 // pred_check_branch
          %1990 = sbr.rel (%p1988) target = $region128
        $region127: #{bottleneck_forward.1} parent=47 // pred_region
          %s1991 = smul.u32 4, %s27
          %s1993 = ssub.s32 512, 512
          %1994 = vsyncadd %s1984, %s1993
          %s1995 = smul.addr %s1991, 2
          %s1996 = smul.addr %s26, 32
          %s1997 = sadd.s32 %s1995, %s1996
          %s1998 = smul.addr %s1997, 64
          %s1999 = scalar_lea.hbm %s8, %s1998
          %s2000 = sshll.u32 %s1987, 4
          %s2001 = int_to_ptr.vmem [resolvable:$true] %s2000
          %2006 = dma.vmem_to_hbm [thread:$0]  %s2001, 512, %s1999, %s1984, 64, 64, 4
        $region128: #{bottleneck_forward.1} parent=47 // pred_fallthru
          _
      $region48: #{bottleneck_forward.1} parent=5 // pred_fallthru
        _
      %p2007 = scmp.le.s32.totalorder 2, %s17
      // Predicated region
      $region129: #{bottleneck_forward.1} parent=5 // pred_check
        %p2008 = pneg %p2007
      $region130: #{bottleneck_forward.1} parent=5 // pred_check_branch
        %2010 = sbr.rel (%p2008) target = $region132
      $region131: #{bottleneck_forward.1} parent=5 // pred_region
        %s2011 = ssub.s32 %s17, 2
        // Predicated region
        $region133: #{bottleneck_forward.1} parent=131 // pred_check
          %p2012 = pneg %p214
        $region134: #{bottleneck_forward.1} parent=131 // pred_check_branch
          %2014 = sbr.rel (%p2012) target = $region136
        $region135: #{bottleneck_forward.1} parent=131 // pred_region
          %s2015 = sand.u32 %s199, 1
          %s2016 = scalar_lea.sflag [#allocation6], %s2015
          %s2017 = sand.u32 %s199, 1
          %s2018 = smul.addr %s2017, 32
          %s2019 = scalar_lea.vmem [#allocation5], %s2018
          %2020 = dma.done %s2016, 512
        $region136: #{bottleneck_forward.1} parent=131 // pred_fallthru
          _
      $region132: #{bottleneck_forward.1} parent=5 // pred_fallthru
        _
    $region6: #{bottleneck_forward.1} parent=1 // loop_footer
      %s21 = sadd.s32 1, %s17
    $region7: #{bottleneck_forward.1} parent=1 // loop_footer_branch
      %16 = sbr.rel target = $region3
    $region8: #{bottleneck_forward.1} parent=1 // loop_exit
      _
    %2021 = vsyncpa [#allocation6], 1
    %s2022 = scalar_lea.sflag [#allocation6], 1
    %2023 = vsyncpa %s2022, 1
  %2024 = vsyncmov [#allocation4]
  %s2025 = vpop.sfrf %2024
  %p2026 = scmp.eq.s32.totalorder %s2025, 0
  %p2027 = pneg %p2026
  %2029 = shalt.err (%p2027)
  %s2030 = scalar_lea.sflag [#allocation4], 1
  %2031 = vsyncmov %s2030
  %s2032 = vpop.sfrf %2031
  %p2033 = scmp.eq.s32.totalorder %s2032, 0
  %p2034 = pneg %p2033
  %2036 = shalt.err (%p2034)

</llo_original>
